<compile_context>
chip_gen: v7x
topology: tpu7x:2x2x1
jax: 0.10.0
libtpu: 0.0.40
codegen_flags: <defaults>
</compile_context>

<pallas_src>
import functools

import jax
import jax.numpy as jnp
from jax.experimental import pallas as pl
from jax.experimental.pallas import tpu as pltpu


# ----------------------------------------------------------------------------
# Pallas kernel: fused unfold + RBF-KAN layer for one batch sample.
# ----------------------------------------------------------------------------
def _rbf_kan_conv_kernel(x_ref, cw_ref, cb_ref, wt_ref, o_ref, *,
                         ksize, wp, l_out, stride, alpha):
    """One batch sample.

    x_ref : (C_in, N_flat)   zero-padded image, flattened row-major with row
                             length `wp` (plus slack rows), f32 or bf16.
    cw_ref: (k*k, K, C_in)   centers pre-scaled by 2*alpha, tap-major.
    cb_ref: (K, 1)           -alpha * ||c||^2 per center.
    wt_ref: (C_out, K)       mixing weights, transposed.
    o_ref : (C_out, l_out)   output in padded-width coordinates, lane axis
                             rounded up to a multiple of 128 (lane-dense).
    """
    acc = None   # (K, l_out)    running 2*alpha*<x, c> cross-term
    xsq = None   # (C_in, l_out) running per-channel x^2

    for i in range(ksize):
        for j in range(ksize):
            base = i * wp + j                                      # static offset
            if stride == 1:
                win = x_ref[:, pl.ds(base, l_out)]                 # (C_in, L)
            else:
                # TODO(synk): stride > 1 path (strided lane slice) is untested.
                win = x_ref[:, pl.ds(base, l_out, stride=stride)]
            win = win.astype(jnp.float32)
            tap = cw_ref[i * ksize + j].astype(jnp.float32)        # (K, C_in)
            t = jnp.dot(tap, win, preferred_element_type=jnp.float32)  # (K, L)
            acc = t if acc is None else acc + t
            sq = win * win
            xsq = sq if xsq is None else xsq + sq

    # -alpha*||x - c||^2 = 2*alpha*<x,c> - alpha*||c||^2 - alpha*||x||^2
    logits = acc + cb_ref[...] - alpha * jnp.sum(xsq, axis=0, keepdims=True)
    phi = jnp.exp(logits)                                          # (K, L)
    o_ref[...] = jnp.dot(wt_ref[...], phi,
                         preferred_element_type=jnp.float32).astype(o_ref.dtype)


# ----------------------------------------------------------------------------
# Host wrapper: single small input pad + parameter folding, then pallas_call.
# ----------------------------------------------------------------------------
def rbf_kan_conv2d(x, centers, weights, *, kernel_size, stride=1, padding=0,
                   alpha=1.0, input_dtype=None):
    """Forward of RBFKANConv2d.  x: (B, C_in, H, W) -> (B, C_out, out_h, out_w)."""
    b, c_in, h, w = x.shape
    k = kernel_size
    num_centers, d = centers.shape
    c_out = weights.shape[1]
    assert d == c_in * k * k, (d, c_in, k)
    assert weights.shape == (num_centers, c_out)

    out_h = (h + 2 * padding - k) // stride + 1
    out_w = (w + 2 * padding - k) // stride + 1
    hp = h + 2 * padding
    wp = w + 2 * padding
    l_pad = out_h * wp                       # valid length, padded-width coords
    l_out = -(-l_pad // 128) * 128           # lane-dense: round up to 128 multiple

    # The deepest tap's lane slice may reach past Hp*Wp; cover the overrun with
    # whole extra zero rows so ONE spatial pad provides all the slack (the
    # extra lanes then read zeros -> exp() stays benign in the padding).
    max_end = (k - 1) * wp + (k - 1) + stride * (l_out - 1) + 1
    overrun = max(0, max_end - hp * wp)
    extra_rows = -(-overrun // wp)           # ceil-div
    xp = jnp.pad(x, ((0, 0), (0, 0),
                     (padding, padding + extra_rows),
                     (padding, padding)))
    n_flat = (hp + extra_rows) * wp
    xflat = xp.reshape(b, c_in, n_flat)      # contiguous -> free reshape
    if input_dtype is not None:
        xflat = xflat.astype(input_dtype)    # e.g. bf16: halve input HBM bytes

    # Host-side parameter folding (tiny, once per call):
    #   centers scaled by 2*alpha and rearranged tap-major, -alpha*||c||^2,
    #   weights transposed so the kernel does only matmuls + one exp.
    centers_f32 = centers.astype(jnp.float32)
    cw = (2.0 * alpha) * centers_f32                               # (K, D)
    cw = cw.reshape(num_centers, c_in, k, k)
    cw = jnp.transpose(cw, (2, 3, 0, 1)).reshape(k * k, num_centers, c_in)
    c_bias = (-alpha) * jnp.sum(centers_f32 * centers_f32, axis=1, keepdims=True)
    w_t = jnp.transpose(weights.astype(jnp.float32))               # (C_out, K)

    kernel = functools.partial(_rbf_kan_conv_kernel, ksize=k, wp=wp,
                               l_out=l_out, stride=stride, alpha=float(alpha))

    out_flat = pl.pallas_call(
        kernel,
        out_shape=jax.ShapeDtypeStruct((b, c_out, l_out), jnp.float32),
        grid_spec=pltpu.PrefetchScalarGridSpec(
            num_scalar_prefetch=0,
            grid=(b,),                                   # one whole image / step
            in_specs=[
                pl.BlockSpec((None, c_in, n_flat), lambda bi: (bi, 0, 0)),
                pl.BlockSpec((k * k, num_centers, c_in), lambda bi: (0, 0, 0)),
                pl.BlockSpec((num_centers, 1), lambda bi: (0, 0)),
                pl.BlockSpec((c_out, num_centers), lambda bi: (0, 0)),
            ],
            out_specs=pl.BlockSpec((None, c_out, l_out), lambda bi: (bi, 0, 0)),
        ),
        compiler_params=pltpu.CompilerParams(
            dimension_semantics=("parallel",)),          # v7x: 2 TCs share batch
    )(xflat, cw, c_bias, w_t)

    # Drop the lane-alignment tail and the (Wp - out_w) garbage columns per
    # output row.  Reshape is free; the slice is the only extra output pass,
    # replacing the old im2col materialization and output transpose.
    out = out_flat[:, :, :l_pad].reshape(b, c_out, out_h, wp)[:, :, :, :out_w]
    return out


# ----------------------------------------------------------------------------
# Pure-JAX reference (no Pallas) for a correctness check.
# ----------------------------------------------------------------------------
def unfold_nchw(x, kernel_size, stride, padding):
    """F.unfold for NCHW input -> (B, C*k*k, L) with torch's column ordering."""
    b, c, h, w = x.shape
    k = kernel_size
    out_h = (h + 2 * padding - k) // stride + 1
    out_w = (w + 2 * padding - k) // stride + 1
    xp = jnp.pad(x, ((0, 0), (0, 0), (padding, padding), (padding, padding)))
    cols = []
    for i in range(k):
        for j in range(k):
            cols.append(xp[:, :,
                           i:i + stride * out_h:stride,
                           j:j + stride * out_w:stride])      # (B, C, oh, ow)
    patches = jnp.stack(cols, axis=2)                         # (B, C, k*k, oh, ow)
    patches = patches.reshape(b, c * k * k, out_h * out_w)    # channel-major
    return patches, out_h, out_w


def rbf_kan_conv2d_ref(x, centers, weights, *, kernel_size, stride=1,
                       padding=0, alpha=1.0):
    b = x.shape[0]
    c_out = weights.shape[1]
    x_unfold, out_h, out_w = unfold_nchw(x, kernel_size, stride, padding)
    x_flat = jnp.transpose(x_unfold, (0, 2, 1)).reshape(b * out_h * out_w, -1)
    diff = x_flat[:, None, :] - centers[None, :, :]
    d2 = jnp.sum(diff * diff, axis=-1)
    phi = jnp.exp(-alpha * d2)
    out_flat = phi @ weights
    out = jnp.transpose(out_flat.reshape(b, out_h * out_w, c_out), (0, 2, 1))
    return out.reshape(b, c_out, out_h, out_w)


if __name__ == "__main__":
    # Module config (small, consistent with the forward pass):
    B, C_IN, H, W = 2, 4, 16, 16
    C_OUT = 8
    KSIZE, STRIDE, PAD = 3, 1, 1
    NUM_CENTERS = 8            # RBFKANLayer grid size
    ALPHA = 1.0                # RBF width
    D = C_IN * KSIZE * KSIZE   # 36 input features to the KAN layer

    key = jax.random.PRNGKey(0)
    kx, kc, kw = jax.random.split(key, 3)
    x = jax.random.normal(kx, (B, C_IN, H, W), dtype=jnp.float32)
    centers = jax.random.normal(kc, (NUM_CENTERS, D), dtype=jnp.float32)
    weights = jax.random.normal(kw, (NUM_CENTERS, C_OUT), dtype=jnp.float32)

    # f32 input stream, strict check against the pure-JAX reference.
    out = rbf_kan_conv2d(x, centers, weights, kernel_size=KSIZE,
                         stride=STRIDE, padding=PAD, alpha=ALPHA)
    out = jax.block_until_ready(out)
    ref = rbf_kan_conv2d_ref(x, centers, weights, kernel_size=KSIZE,
                             stride=STRIDE, padding=PAD, alpha=ALPHA)
    assert out.shape == (B, C_OUT, H, W), out.shape
    assert jnp.allclose(out, ref, atol=2e-4, rtol=2e-4), \
        float(jnp.max(jnp.abs(out - ref)))

    # bf16 input stream (halves the dominant HBM read); math is f32 in-kernel.
    out_bf16 = rbf_kan_conv2d(x, centers, weights, kernel_size=KSIZE,
                              stride=STRIDE, padding=PAD, alpha=ALPHA,
                              input_dtype=jnp.bfloat16)
    out_bf16 = jax.block_until_ready(out_bf16)
    x_rounded = x.astype(jnp.bfloat16).astype(jnp.float32)
    ref_bf16 = rbf_kan_conv2d_ref(x_rounded, centers, weights,
                                  kernel_size=KSIZE, stride=STRIDE,
                                  padding=PAD, alpha=ALPHA)
    assert jnp.allclose(out_bf16, ref_bf16, atol=2e-3, rtol=2e-3), \
        float(jnp.max(jnp.abs(out_bf16 - ref_bf16)))

    print("KERNEL_OK")
</pallas_src>

<mosaic_0001>
module attributes {stable_mosaic.version = 11 : i64} {
  func.func @_rbf_kan_conv_kernel(%arg0: i32, %arg1: memref<1x4x432xf32, #tpu.memory_space<vmem>>, %arg2: memref<9x8x4xf32, #tpu.memory_space<vmem>>, %arg3: memref<8x1xf32, #tpu.memory_space<vmem>>, %arg4: memref<8x8xf32, #tpu.memory_space<vmem>>, %arg5: memref<1x8x384xf32, #tpu.memory_space<vmem>>) attributes {dimension_semantics = [#tpu.dimension_semantics<parallel>], iteration_bounds = array<i64: 2>, scalar_prefetch = 0 : i64, scratch_operands = 0 : i64, tpu.core_type = #tpu.core_type<tc>, window_params = [{transform_indices = @transform_0, window_bounds = array<i64: 1, 4, 432>}, {pipeline_mode = #tpu.pipeline_mode<synchronous>, transform_indices = @transform_1, window_bounds = array<i64: 9, 8, 4>}, {pipeline_mode = #tpu.pipeline_mode<synchronous>, transform_indices = @transform_2, window_bounds = array<i64: 8, 1>}, {pipeline_mode = #tpu.pipeline_mode<synchronous>, transform_indices = @transform_3, window_bounds = array<i64: 8, 8>}, {transform_indices = @transform_4, window_bounds = array<i64: 1, 8, 384>}]} {
    %c0 = arith.constant 0 : index
    %c0_0 = arith.constant 0 : index
    %c0_1 = arith.constant 0 : index
    %0 = vector.load %arg1[%c0, %c0_0, %c0_1] : memref<1x4x432xf32, #tpu.memory_space<vmem>>, vector<1x4x384xf32>
    %1 = vector.shape_cast %0 : vector<1x4x384xf32> to vector<4x384xf32>
    %c0_2 = arith.constant 0 : index
    %c0_3 = arith.constant 0 : index
    %c0_4 = arith.constant 0 : index
    %2 = vector.load %arg2[%c0_2, %c0_3, %c0_4] : memref<9x8x4xf32, #tpu.memory_space<vmem>>, vector<1x8x4xf32>
    %3 = vector.shape_cast %2 : vector<1x8x4xf32> to vector<8x4xf32>
    %cst = arith.constant dense<0.000000e+00> : vector<8x384xf32>
    %4 = tpu.matmul %3, %1, %cst {dimension_numbers = #tpu.dot_dimension_numbers<[1], [0], [0], [1], [0, 0, 1, 1], [], []>} : vector<8x4xf32>, vector<4x384xf32>, vector<8x384xf32> -> vector<8x384xf32>
    %5 = arith.mulf %1, %1 : vector<4x384xf32>
    %c0_5 = arith.constant 0 : index
    %c0_6 = arith.constant 0 : index
    %c1 = arith.constant 1 : index
    %6 = vector.load %arg1[%c0_5, %c0_6, %c1] : memref<1x4x432xf32, #tpu.memory_space<vmem>>, vector<1x4x384xf32>
    %7 = vector.shape_cast %6 : vector<1x4x384xf32> to vector<4x384xf32>
    %c1_7 = arith.constant 1 : index
    %c0_8 = arith.constant 0 : index
    %c0_9 = arith.constant 0 : index
    %8 = vector.load %arg2[%c1_7, %c0_8, %c0_9] : memref<9x8x4xf32, #tpu.memory_space<vmem>>, vector<1x8x4xf32>
    %9 = vector.shape_cast %8 : vector<1x8x4xf32> to vector<8x4xf32>
    %cst_10 = arith.constant dense<0.000000e+00> : vector<8x384xf32>
    %10 = tpu.matmul %9, %7, %cst_10 {dimension_numbers = #tpu.dot_dimension_numbers<[1], [0], [0], [1], [0, 0, 1, 1], [], []>} : vector<8x4xf32>, vector<4x384xf32>, vector<8x384xf32> -> vector<8x384xf32>
    %11 = arith.addf %4, %10 : vector<8x384xf32>
    %12 = arith.mulf %7, %7 : vector<4x384xf32>
    %13 = arith.addf %5, %12 : vector<4x384xf32>
    %c0_11 = arith.constant 0 : index
    %c0_12 = arith.constant 0 : index
    %c2 = arith.constant 2 : index
    %14 = vector.load %arg1[%c0_11, %c0_12, %c2] : memref<1x4x432xf32, #tpu.memory_space<vmem>>, vector<1x4x384xf32>
    %15 = vector.shape_cast %14 : vector<1x4x384xf32> to vector<4x384xf32>
    %c2_13 = arith.constant 2 : index
    %c0_14 = arith.constant 0 : index
    %c0_15 = arith.constant 0 : index
    %16 = vector.load %arg2[%c2_13, %c0_14, %c0_15] : memref<9x8x4xf32, #tpu.memory_space<vmem>>, vector<1x8x4xf32>
    %17 = vector.shape_cast %16 : vector<1x8x4xf32> to vector<8x4xf32>
    %cst_16 = arith.constant dense<0.000000e+00> : vector<8x384xf32>
    %18 = tpu.matmul %17, %15, %cst_16 {dimension_numbers = #tpu.dot_dimension_numbers<[1], [0], [0], [1], [0, 0, 1, 1], [], []>} : vector<8x4xf32>, vector<4x384xf32>, vector<8x384xf32> -> vector<8x384xf32>
    %19 = arith.addf %11, %18 : vector<8x384xf32>
    %20 = arith.mulf %15, %15 : vector<4x384xf32>
    %21 = arith.addf %13, %20 : vector<4x384xf32>
    %c0_17 = arith.constant 0 : index
    %c0_18 = arith.constant 0 : index
    %c18 = arith.constant 18 : index
    %22 = vector.load %arg1[%c0_17, %c0_18, %c18] : memref<1x4x432xf32, #tpu.memory_space<vmem>>, vector<1x4x384xf32>
    %23 = vector.shape_cast %22 : vector<1x4x384xf32> to vector<4x384xf32>
    %c3 = arith.constant 3 : index
    %c0_19 = arith.constant 0 : index
    %c0_20 = arith.constant 0 : index
    %24 = vector.load %arg2[%c3, %c0_19, %c0_20] : memref<9x8x4xf32, #tpu.memory_space<vmem>>, vector<1x8x4xf32>
    %25 = vector.shape_cast %24 : vector<1x8x4xf32> to vector<8x4xf32>
    %cst_21 = arith.constant dense<0.000000e+00> : vector<8x384xf32>
    %26 = tpu.matmul %25, %23, %cst_21 {dimension_numbers = #tpu.dot_dimension_numbers<[1], [0], [0], [1], [0, 0, 1, 1], [], []>} : vector<8x4xf32>, vector<4x384xf32>, vector<8x384xf32> -> vector<8x384xf32>
    %27 = arith.addf %19, %26 : vector<8x384xf32>
    %28 = arith.mulf %23, %23 : vector<4x384xf32>
    %29 = arith.addf %21, %28 : vector<4x384xf32>
    %c0_22 = arith.constant 0 : index
    %c0_23 = arith.constant 0 : index
    %c19 = arith.constant 19 : index
    %30 = vector.load %arg1[%c0_22, %c0_23, %c19] : memref<1x4x432xf32, #tpu.memory_space<vmem>>, vector<1x4x384xf32>
    %31 = vector.shape_cast %30 : vector<1x4x384xf32> to vector<4x384xf32>
    %c4 = arith.constant 4 : index
    %c0_24 = arith.constant 0 : index
    %c0_25 = arith.constant 0 : index
    %32 = vector.load %arg2[%c4, %c0_24, %c0_25] : memref<9x8x4xf32, #tpu.memory_space<vmem>>, vector<1x8x4xf32>
    %33 = vector.shape_cast %32 : vector<1x8x4xf32> to vector<8x4xf32>
    %cst_26 = arith.constant dense<0.000000e+00> : vector<8x384xf32>
    %34 = tpu.matmul %33, %31, %cst_26 {dimension_numbers = #tpu.dot_dimension_numbers<[1], [0], [0], [1], [0, 0, 1, 1], [], []>} : vector<8x4xf32>, vector<4x384xf32>, vector<8x384xf32> -> vector<8x384xf32>
    %35 = arith.addf %27, %34 : vector<8x384xf32>
    %36 = arith.mulf %31, %31 : vector<4x384xf32>
    %37 = arith.addf %29, %36 : vector<4x384xf32>
    %c0_27 = arith.constant 0 : index
    %c0_28 = arith.constant 0 : index
    %c20 = arith.constant 20 : index
    %38 = vector.load %arg1[%c0_27, %c0_28, %c20] : memref<1x4x432xf32, #tpu.memory_space<vmem>>, vector<1x4x384xf32>
    %39 = vector.shape_cast %38 : vector<1x4x384xf32> to vector<4x384xf32>
    %c5 = arith.constant 5 : index
    %c0_29 = arith.constant 0 : index
    %c0_30 = arith.constant 0 : index
    %40 = vector.load %arg2[%c5, %c0_29, %c0_30] : memref<9x8x4xf32, #tpu.memory_space<vmem>>, vector<1x8x4xf32>
    %41 = vector.shape_cast %40 : vector<1x8x4xf32> to vector<8x4xf32>
    %cst_31 = arith.constant dense<0.000000e+00> : vector<8x384xf32>
    %42 = tpu.matmul %41, %39, %cst_31 {dimension_numbers = #tpu.dot_dimension_numbers<[1], [0], [0], [1], [0, 0, 1, 1], [], []>} : vector<8x4xf32>, vector<4x384xf32>, vector<8x384xf32> -> vector<8x384xf32>
    %43 = arith.addf %35, %42 : vector<8x384xf32>
    %44 = arith.mulf %39, %39 : vector<4x384xf32>
    %45 = arith.addf %37, %44 : vector<4x384xf32>
    %c0_32 = arith.constant 0 : index
    %c0_33 = arith.constant 0 : index
    %c36 = arith.constant 36 : index
    %46 = vector.load %arg1[%c0_32, %c0_33, %c36] : memref<1x4x432xf32, #tpu.memory_space<vmem>>, vector<1x4x384xf32>
    %47 = vector.shape_cast %46 : vector<1x4x384xf32> to vector<4x384xf32>
    %c6 = arith.constant 6 : index
    %c0_34 = arith.constant 0 : index
    %c0_35 = arith.constant 0 : index
    %48 = vector.load %arg2[%c6, %c0_34, %c0_35] : memref<9x8x4xf32, #tpu.memory_space<vmem>>, vector<1x8x4xf32>
    %49 = vector.shape_cast %48 : vector<1x8x4xf32> to vector<8x4xf32>
    %cst_36 = arith.constant dense<0.000000e+00> : vector<8x384xf32>
    %50 = tpu.matmul %49, %47, %cst_36 {dimension_numbers = #tpu.dot_dimension_numbers<[1], [0], [0], [1], [0, 0, 1, 1], [], []>} : vector<8x4xf32>, vector<4x384xf32>, vector<8x384xf32> -> vector<8x384xf32>
    %51 = arith.addf %43, %50 : vector<8x384xf32>
    %52 = arith.mulf %47, %47 : vector<4x384xf32>
    %53 = arith.addf %45, %52 : vector<4x384xf32>
    %c0_37 = arith.constant 0 : index
    %c0_38 = arith.constant 0 : index
    %c37 = arith.constant 37 : index
    %54 = vector.load %arg1[%c0_37, %c0_38, %c37] : memref<1x4x432xf32, #tpu.memory_space<vmem>>, vector<1x4x384xf32>
    %55 = vector.shape_cast %54 : vector<1x4x384xf32> to vector<4x384xf32>
    %c7 = arith.constant 7 : index
    %c0_39 = arith.constant 0 : index
    %c0_40 = arith.constant 0 : index
    %56 = vector.load %arg2[%c7, %c0_39, %c0_40] : memref<9x8x4xf32, #tpu.memory_space<vmem>>, vector<1x8x4xf32>
    %57 = vector.shape_cast %56 : vector<1x8x4xf32> to vector<8x4xf32>
    %cst_41 = arith.constant dense<0.000000e+00> : vector<8x384xf32>
    %58 = tpu.matmul %57, %55, %cst_41 {dimension_numbers = #tpu.dot_dimension_numbers<[1], [0], [0], [1], [0, 0, 1, 1], [], []>} : vector<8x4xf32>, vector<4x384xf32>, vector<8x384xf32> -> vector<8x384xf32>
    %59 = arith.addf %51, %58 : vector<8x384xf32>
    %60 = arith.mulf %55, %55 : vector<4x384xf32>
    %61 = arith.addf %53, %60 : vector<4x384xf32>
    %c0_42 = arith.constant 0 : index
    %c0_43 = arith.constant 0 : index
    %c38 = arith.constant 38 : index
    %62 = vector.load %arg1[%c0_42, %c0_43, %c38] : memref<1x4x432xf32, #tpu.memory_space<vmem>>, vector<1x4x384xf32>
    %63 = vector.shape_cast %62 : vector<1x4x384xf32> to vector<4x384xf32>
    %c8 = arith.constant 8 : index
    %c0_44 = arith.constant 0 : index
    %c0_45 = arith.constant 0 : index
    %64 = vector.load %arg2[%c8, %c0_44, %c0_45] : memref<9x8x4xf32, #tpu.memory_space<vmem>>, vector<1x8x4xf32>
    %65 = vector.shape_cast %64 : vector<1x8x4xf32> to vector<8x4xf32>
    %cst_46 = arith.constant dense<0.000000e+00> : vector<8x384xf32>
    %66 = tpu.matmul %65, %63, %cst_46 {dimension_numbers = #tpu.dot_dimension_numbers<[1], [0], [0], [1], [0, 0, 1, 1], [], []>} : vector<8x4xf32>, vector<4x384xf32>, vector<8x384xf32> -> vector<8x384xf32>
    %67 = arith.addf %59, %66 : vector<8x384xf32>
    %68 = arith.mulf %63, %63 : vector<4x384xf32>
    %69 = arith.addf %61, %68 : vector<4x384xf32>
    %c0_47 = arith.constant 0 : index
    %c0_48 = arith.constant 0 : index
    %70 = vector.load %arg3[%c0_47, %c0_48] : memref<8x1xf32, #tpu.memory_space<vmem>>, vector<8x1xf32>
    %71 = vector.broadcast %70 : vector<8x1xf32> to vector<8x384xf32>
    %72 = arith.addf %67, %71 : vector<8x384xf32>
    %cst_49 = arith.constant dense<0.000000e+00> : vector<384xf32>
    %73 = vector.multi_reduction <add>, %69, %cst_49 [0] : vector<4x384xf32> to vector<384xf32>
    %74 = vector.shape_cast %73 : vector<384xf32> to vector<1x384xf32>
    %cst_50 = arith.constant 1.000000e+00 : f32
    %75 = vector.broadcast %cst_50 : f32 to vector<1x384xf32>
    %76 = arith.mulf %75, %74 : vector<1x384xf32>
    %77 = vector.broadcast %76 : vector<1x384xf32> to vector<8x384xf32>
    %78 = arith.subf %72, %77 : vector<8x384xf32>
    %79 = math.exp %78 : vector<8x384xf32>
    %c0_51 = arith.constant 0 : index
    %c0_52 = arith.constant 0 : index
    %80 = vector.load %arg4[%c0_51, %c0_52] : memref<8x8xf32, #tpu.memory_space<vmem>>, vector<8x8xf32>
    %cst_53 = arith.constant dense<0.000000e+00> : vector<8x384xf32>
    %81 = tpu.matmul %80, %79, %cst_53 {dimension_numbers = #tpu.dot_dimension_numbers<[1], [0], [0], [1], [0, 0, 1, 1], [], []>} : vector<8x8xf32>, vector<8x384xf32>, vector<8x384xf32> -> vector<8x384xf32>
    %c0_54 = arith.constant 0 : index
    %c0_55 = arith.constant 0 : index
    %c0_56 = arith.constant 0 : index
    %82 = vector.load %arg5[%c0_54, %c0_55, %c0_56] : memref<1x8x384xf32, #tpu.memory_space<vmem>>, vector<1x8x384xf32>
    %83 = vector.shape_cast %82 : vector<1x8x384xf32> to vector<8x384xf32>
    %84 = vector.shape_cast %81 : vector<8x384xf32> to vector<1x8x384xf32>
    tpu.vector_store %arg5[%c0_54, %c0_55, %c0_56], %84 {strides = array<i32>} : memref<1x8x384xf32, #tpu.memory_space<vmem>>, vector<1x8x384xf32>,
    return
  }
  func.func @transform_0(%arg0: i32) -> (i32, i32, i32) {
    %c0_i32 = arith.constant 0 : i32
    %c0_i32_0 = arith.constant 0 : i32
    %c0_i32_1 = arith.constant 0 : i32
    return %arg0, %c0_i32, %c0_i32_0 : i32, i32, i32
  }
  func.func @transform_1(%arg0: i32) -> (i32, i32, i32) {
    %c0_i32 = arith.constant 0 : i32
    %c0_i32_0 = arith.constant 0 : i32
    %c0_i32_1 = arith.constant 0 : i32
    %c0_i32_2 = arith.constant 0 : i32
    return %c0_i32, %c0_i32_0, %c0_i32_1 : i32, i32, i32
  }
  func.func @transform_2(%arg0: i32) -> (i32, i32) {
    %c0_i32 = arith.constant 0 : i32
    %c0_i32_0 = arith.constant 0 : i32
    %c0_i32_1 = arith.constant 0 : i32
    return %c0_i32, %c0_i32_0 : i32, i32
  }
  func.func @transform_3(%arg0: i32) -> (i32, i32) {
    %c0_i32 = arith.constant 0 : i32
    %c0_i32_0 = arith.constant 0 : i32
    %c0_i32_1 = arith.constant 0 : i32
    return %c0_i32, %c0_i32_0 : i32, i32
  }
  func.func @transform_4(%arg0: i32) -> (i32, i32, i32) {
    %c0_i32 = arith.constant 0 : i32
    %c0_i32_0 = arith.constant 0 : i32
    %c0_i32_1 = arith.constant 0 : i32
    return %arg0, %c0_i32, %c0_i32_0 : i32, i32, i32
  }
}

</mosaic_0001>

<llo_original>
// kernel: tpu_custom_call.1
$region0: #{tpu_custom_call.1}
  #allocation0 [shape = 'u32[]', space=smem, size = 0x4, offset = 0x4, fixed_abs, tag = 'smem constant byte address 0x4 - core index']
  #allocation1 [shape = 'u32[144,128]{1,0:T(1,128)}', space=vmem, size = 0x12000, scoped, tag = 'internal scratch']
  %s0 = inlined_call_operand.vmem [shape: f32[2,4,432], index: 0, kind: input, shape index: {}]
  %s1 = inlined_call_operand.vmem [shape: f32[9,8,4], index: 1, kind: input, shape index: {}]
  %s2 = inlined_call_operand.vmem [shape: f32[8,1], index: 2, kind: input, shape index: {}]
  %s3 = inlined_call_operand.vmem [shape: f32[8,8], index: 3, kind: input, shape index: {}]
  %s4 = inlined_call_operand.hbm [shape: f32[2,8,384], index: 4, kind: output, shape index: {}]
  %s5 = sld [smem:[#allocation0]]
  $region49: #{tpu_custom_call.1} parent=0
    _
  %s7 = ssub.s32 1, %s5
  %s8 = scalar_select 0, %s7, %s5
  $region1: #{tpu_custom_call.1} parent=0
    #allocation2 [shape = 'u8[24576]{0}', space=vmem, size = 0x6000, scoped, tag = 'output window, operand 0']
    #allocation3 [shape = 's32[2]{0}', space=sflag, size = 0x8, scoped, tag = 'scoped memory for tpu_custom_call.1']
    %9 = vsyncpa [#allocation3], 0
    %s10 = scalar_lea.sflag [#allocation3], 1
    %11 = vsyncpa %s10, 0
    loop: start=0, step=1, limit=4
    $region2: #{tpu_custom_call.1} parent=1 // loop_pre_header
      _
    $region3: #{tpu_custom_call.1} parent=1 // loop_header
      %s13 = sphi 0, %s17
      %p14 = scmp.ge.s32.totalorder %s13, 4
      %s23 = sphi 0, %s25
      %s26 = sphi 0, %s23
      %s27 = sphi 0, %s26
      %s43 = sphi 0, %s27
      %s47 = sphi 0, %s47
      %s49 = sphi 0, %s47
      %s50 = sphi 0, %s49
      %s64 = sphi 0, %s50
      %s68 = sphi 0, %s68
      %s70 = sphi 0, %s68
      %s71 = sphi 0, %s70
      %s85 = sphi 0, %s71
      %s89 = sphi 0, %s89
      %s91 = sphi 0, %s89
      %s92 = sphi 0, %s91
      %s106 = sphi 0, %s92
      %s112 = sphi 0, %s114
      %s115 = sphi 0, %s112
      %s116 = sphi 0, %s115
      %s132 = sphi 0, %s116
    $region4: #{tpu_custom_call.1} parent=1 // loop_header_branch
      %16 = sbr.rel (%p14) target = $region8
    $region5: #{tpu_custom_call.1} parent=1 // loop_body
      %s18 = ssub.s32 %s13, 1
      %s19 = ssub.s32 %s13, 2
      %s20 = sadd.s32 %s13, 1
      %s21 = ssub.s32 %s13, %s20
      %p22 = scmp.eq.s32.totalorder %s21, 0
      %s24 = sadd.s32 %s23, 1
      %s25 = scalar_select %p22, %s23, %s24
      %p28 = pneg %p22
      %p29 = scmp.eq.s32.totalorder %s13, 1
      %p30 = por %p28, %p29
      %p31 = scmp.ne.s32.totalorder %s23, %s26
      %p32 = scmp.eq.s32.totalorder %s13, 0
      %p33 = por %p31, %p32
      %p34 = scmp.ne.s32.totalorder %s23, %s26
      %p35 = scmp.eq.s32.totalorder %s18, 1
      %p36 = por %p34, %p35
      %p37 = scmp.ne.s32.totalorder %s26, %s27
      %p38 = scmp.eq.s32.totalorder %s18, 0
      %p39 = por %p37, %p38
      %p40 = scmp.ne.s32.totalorder %s26, %s27
      %p41 = scmp.eq.s32.totalorder %s19, 1
      %p42 = por %p40, %p41
      %p44 = scmp.ne.s32.totalorder %s27, %s43
      %p45 = scmp.eq.s32.totalorder %s19, 0
      %p46 = por %p44, %p45
      %s48 = sadd.s32 %s47, 1
      %p51 = scmp.eq.s32.totalorder %s13, 1
      %p52 = scmp.ne.s32.totalorder %s47, %s49
      %p53 = scmp.eq.s32.totalorder %s13, 0
      %p54 = por %p52, %p53
      %p55 = scmp.ne.s32.totalorder %s47, %s49
      %p56 = scmp.eq.s32.totalorder %s18, 1
      %p57 = por %p55, %p56
      %p58 = scmp.ne.s32.totalorder %s49, %s50
      %p59 = scmp.eq.s32.totalorder %s18, 0
      %p60 = por %p58, %p59
      %p61 = scmp.ne.s32.totalorder %s49, %s50
      %p62 = scmp.eq.s32.totalorder %s19, 1
      %p63 = por %p61, %p62
      %p65 = scmp.ne.s32.totalorder %s50, %s64
      %p66 = scmp.eq.s32.totalorder %s19, 0
      %p67 = por %p65, %p66
      %s69 = sadd.s32 %s68, 1
      %p72 = scmp.eq.s32.totalorder %s13, 1
      %p73 = scmp.ne.s32.totalorder %s68, %s70
      %p74 = scmp.eq.s32.totalorder %s13, 0
      %p75 = por %p73, %p74
      %p76 = scmp.ne.s32.totalorder %s68, %s70
      %p77 = scmp.eq.s32.totalorder %s18, 1
      %p78 = por %p76, %p77
      %p79 = scmp.ne.s32.totalorder %s70, %s71
      %p80 = scmp.eq.s32.totalorder %s18, 0
      %p81 = por %p79, %p80
      %p82 = scmp.ne.s32.totalorder %s70, %s71
      %p83 = scmp.eq.s32.totalorder %s19, 1
      %p84 = por %p82, %p83
      %p86 = scmp.ne.s32.totalorder %s71, %s85
      %p87 = scmp.eq.s32.totalorder %s19, 0
      %p88 = por %p86, %p87
      %s90 = sadd.s32 %s89, 1
      %p93 = scmp.eq.s32.totalorder %s13, 1
      %p94 = scmp.ne.s32.totalorder %s89, %s91
      %p95 = scmp.eq.s32.totalorder %s13, 0
      %p96 = por %p94, %p95
      %p97 = scmp.ne.s32.totalorder %s89, %s91
      %p98 = scmp.eq.s32.totalorder %s18, 1
      %p99 = por %p97, %p98
      %p100 = scmp.ne.s32.totalorder %s91, %s92
      %p101 = scmp.eq.s32.totalorder %s18, 0
      %p102 = por %p100, %p101
      %p103 = scmp.ne.s32.totalorder %s91, %s92
      %p104 = scmp.eq.s32.totalorder %s19, 1
      %p105 = por %p103, %p104
      %p107 = scmp.ne.s32.totalorder %s92, %s106
      %p108 = scmp.eq.s32.totalorder %s19, 0
      %p109 = por %p107, %p108
      %s110 = ssub.s32 %s13, %s20
      %p111 = scmp.eq.s32.totalorder %s110, 0
      %s113 = sadd.s32 %s112, 1
      %s114 = scalar_select %p111, %s112, %s113
      %p117 = pneg %p111
      %p118 = scmp.eq.s32.totalorder %s13, 1
      %p119 = por %p117, %p118
      %p120 = scmp.ne.s32.totalorder %s112, %s115
      %p121 = scmp.eq.s32.totalorder %s13, 0
      %p122 = por %p120, %p121
      %p123 = scmp.ne.s32.totalorder %s112, %s115
      %p124 = scmp.eq.s32.totalorder %s18, 1
      %p125 = por %p123, %p124
      %p126 = scmp.ne.s32.totalorder %s115, %s116
      %p127 = scmp.eq.s32.totalorder %s18, 0
      %p128 = por %p126, %p127
      %p129 = scmp.ne.s32.totalorder %s115, %s116
      %p130 = scmp.eq.s32.totalorder %s19, 1
      %p131 = por %p129, %p130
      %p133 = scmp.ne.s32.totalorder %s116, %s132
      %p134 = scmp.eq.s32.totalorder %s19, 0
      %p135 = por %p133, %p134
      %p136 = scmp.le.s32.totalorder 1, %s13
      %p137 = scmp.lt.s32.totalorder %s13, 3
      %p138 = pnand %p136, %p137
      %p139 = pneg %p138
      // Predicated region
      $region9: #{tpu_custom_call.1} parent=5 // pred_check
        _
      $region10: #{tpu_custom_call.1} parent=5 // pred_check_branch
        %141 = sbr.rel (%p138) target = $region12
      $region11: #{tpu_custom_call.1} parent=5 // pred_region
        %s142 = ssub.s32 %s13, 1
        // Predicated region
        $region13: #{tpu_custom_call.1} parent=11 // pred_check
          %p143 = pneg %p60
        $region14: #{tpu_custom_call.1} parent=11 // pred_check_branch
          %145 = sbr.rel (%p143) target = $region16
        $region15: #{tpu_custom_call.1} parent=11 // pred_region
          _
        $region16: #{tpu_custom_call.1} parent=11 // pred_fallthru
          _
        // Predicated region
        $region17: #{tpu_custom_call.1} parent=11 // pred_check
          %p146 = pneg %p81
        $region18: #{tpu_custom_call.1} parent=11 // pred_check_branch
          %148 = sbr.rel (%p146) target = $region20
        $region19: #{tpu_custom_call.1} parent=11 // pred_region
          _
        $region20: #{tpu_custom_call.1} parent=11 // pred_fallthru
          _
        // Predicated region
        $region21: #{tpu_custom_call.1} parent=11 // pred_check
          %p149 = pneg %p102
        $region22: #{tpu_custom_call.1} parent=11 // pred_check_branch
          %151 = sbr.rel (%p149) target = $region24
        $region23: #{tpu_custom_call.1} parent=11 // pred_region
          _
        $region24: #{tpu_custom_call.1} parent=11 // pred_fallthru
          _
      $region12: #{tpu_custom_call.1} parent=5 // pred_fallthru
        _
      %p152 = scmp.lt.s32.totalorder %s13, 2
      // Predicated region
      $region25: #{tpu_custom_call.1} parent=5 // pred_check
        %p153 = pneg %p152
      $region26: #{tpu_custom_call.1} parent=5 // pred_check_branch
        %155 = sbr.rel (%p153) target = $region28
      $region27: #{tpu_custom_call.1} parent=5 // pred_region
        // Predicated region
        $region29: #{tpu_custom_call.1} parent=27 // pred_check
          %p156 = pneg %p33
        $region30: #{tpu_custom_call.1} parent=27 // pred_check_branch
          %158 = sbr.rel (%p156) target = $region32
        $region31: #{tpu_custom_call.1} parent=27 // pred_region
          %p159 = scmp.lt.s32.totalorder %s13, 1
          %s160 = scalar_select %p159, %s13, 1
          %s161 = smul.addr %s160, 4
          %s162 = smul.addr %s161, 4
          %s163 = scalar_lea.vmem %s0, %s162
        $region32: #{tpu_custom_call.1} parent=27 // pred_fallthru
          _
      $region28: #{tpu_custom_call.1} parent=5 // pred_fallthru
        _
      %p164 = scmp.le.s32.totalorder 1, %s13
      %p165 = scmp.lt.s32.totalorder %s13, 3
      %p166 = pnand %p164, %p165
      %p167 = pneg %p166
      // Predicated region
      $region33: #{tpu_custom_call.1} parent=5 // pred_check
        _
      $region34: #{tpu_custom_call.1} parent=5 // pred_check_branch
        %169 = sbr.rel (%p166) target = $region36
      $region35: #{tpu_custom_call.1} parent=5 // pred_region
        %s170 = ssub.s32 %s13, 1
        %p171 = scmp.lt.s32.totalorder %s18, 1
        %s172 = scalar_select %p171, %s18, 1
        %s173 = smul.addr %s172, 4
        %s174 = smul.addr %s173, 4
        %s175 = scalar_lea.vmem %s0, %s174
        %p176 = pneg %p39
        %p177 = pneg %p36
        %p178 = pneg %p60
        %p179 = pneg %p57
        %p180 = pneg %p81
        %p181 = pneg %p78
        %p182 = pneg %p102
        %p183 = pneg %p99
        %p184 = pneg %p128
        %p185 = pneg %p125
        %s186 = sand.u32 %s115, 1
        %s187 = scalar_lea.sflag [#allocation3], %s186
        %s188 = sand.u32 %s115, 1
        %s189 = smul.addr %s188, 24
        %s190 = scalar_lea.vmem [#allocation2], %s189
        %p191 = scmp.lt.s32.totalorder %s18, 1
        %s192 = scalar_select %p191, %s18, 1
        %s193 = smul.addr %s192, 4
        %s194 = smul.addr %s193, 4
        %s195 = scalar_lea.vmem %s0, %s194
        %v196 = vld [vmem:[%s195] sm:$0xff]
        %v197 = vld [vmem:[%s195 + $0x8] sm:$0xf]
        %v198 = vld [vmem:[%s1] sm:$0xff]
        %v199 = vmul.f32 %v196, %v196
        %v200 = vmul.f32 %v197, %v197
        %v201 = vld [vmem:[%s195 + $0x8] sm:$0xff]
        %s202 = scalar_lea.vmem %s1, 8
        %v203 = vld [vmem:[%s202] sm:$0xff]
        %v206 = vcombine.high %v196, %v196
        %v207 = vcombine.high %v201, %v201
        %208 = vrot.lane.b32.xlu0 %v196, 127
        %v209 = vpop.permute.xlu0 %208
        %210 = vrot.lane.b32.xlu0 %v206, 127
        %v211 = vpop.permute.xlu0 %210
        %212 = vrot.lane.b32.xlu0 %v201, 127
        %v213 = vpop.permute.xlu0 %212
        %214 = vrot.lane.b32.xlu0 %v207, 127
        %v215 = vpop.permute.xlu0 %214
        %vm216 = vcmask 1039360
        %v217 = vsel %vm216, %v209, %v211
        %v218 = vsel %vm216, %v211, %v213
        %v219 = vsel %vm216, %v213, %v215
        %vm220 = vcmask 31744
        %v222 = vsel %vm220, %v203, 0
        %vm224 = vcmask 1043456
        %v225 = vsel %vm224, %v217, 0
        %v227 = vsel %vm224, %v218, 0
        %v229 = vsel %vm224, %v219, 0
        %231 = vmatprep.subr.mxu0 %v227
        %232 = vmatpush1.msra.mxu0 %v225
        %233 = vmatprep.subr.mxu0 0.0
        %234 = vmatpush1.msra.mxu0 0.0
        %235 = vmatprep.subr.mxu0 0.0
        %236 = vmatpush1.msra.mxu0 0.0
        %237 = vmatprep.subr.mxu0 0.0
        %238 = vmatpush1.msra.mxu0 0.0
        %239 = vmatprep.subr.mxu0 0.0
        %240 = vmatpush1.msra.mxu0 0.0
        %241 = vmatprep.subr.mxu0 0.0
        %242 = vmatpush1.msra.mxu0 0.0
        %243 = vmatprep.subr.mxu0 0.0
        %244 = vmatpush1.msra.mxu0 0.0
        %245 = vmatprep.subr.mxu0 0.0
        %246 = vmatpush1.msra.mxu0 0.0
        %247 = vmatprep.subr.mxu0 0.0
        %248 = vmatpush1.msra.mxu0 0.0
        %249 = vmatprep.subr.mxu0 0.0
        %250 = vmatpush1.msra.mxu0 0.0
        %251 = vmatprep.subr.mxu0 0.0
        %252 = vmatpush1.msra.mxu0 0.0
        %253 = vmatprep.subr.mxu0 0.0
        %254 = vmatpush1.msra.mxu0 0.0
        %255 = vmatprep.subr.mxu0 0.0
        %256 = vmatpush1.msra.mxu0 0.0
        %257 = vmatprep.subr.mxu0 0.0
        %258 = vmatpush1.msra.mxu0 0.0
        %259 = vmatprep.subr.mxu0 0.0
        %260 = vmatpush1.msra.mxu0 0.0
        %261 = vmatprep.subr.mxu0 0.0
        %262 = vmatpush1.msra.mxu0 0.0
        %263 = vmatprep.subr.mxu0 0.0
        %264 = vmatpush1.msra.mxu0 0.0
        %265 = vmatprep.subr.mxu0 0.0
        %266 = vmatpush1.msra.mxu0 0.0
        %267 = vmatprep.subr.mxu0 0.0
        %268 = vmatpush1.msra.mxu0 0.0
        %269 = vmatprep.subr.mxu0 0.0
        %270 = vmatpush1.msra.mxu0 0.0
        %271 = vmatprep.subr.mxu0 0.0
        %272 = vmatpush1.msra.mxu0 0.0
        %273 = vmatprep.subr.mxu0 0.0
        %274 = vmatpush1.msra.mxu0 0.0
        %275 = vmatprep.subr.mxu0 0.0
        %276 = vmatpush1.msra.mxu0 0.0
        %277 = vmatprep.subr.mxu0 0.0
        %278 = vmatpush1.msra.mxu0 0.0
        %279 = vmatprep.subr.mxu0 0.0
        %280 = vmatpush1.msra.mxu0 0.0
        %281 = vmatprep.subr.mxu0 0.0
        %282 = vmatpush1.msra.mxu0 0.0
        %283 = vmatprep.subr.mxu0 0.0
        %284 = vmatpush1.msra.mxu0 0.0
        %285 = vmatprep.subr.mxu0 0.0
        %286 = vmatpush1.msra.mxu0 0.0
        %287 = vmatprep.subr.mxu0 0.0
        %288 = vmatpush1.msra.mxu0 0.0
        %289 = vmatprep.subr.mxu0 0.0
        %290 = vmatpush1.msra.mxu0 0.0
        %291 = vmatprep.subr.mxu0 0.0
        %292 = vmatpush1.msra.mxu0 0.0
        %293 = vmatprep.subr.mxu0 0.0
        %294 = vmatpush1.msra.mxu0 0.0
        %295 = vmatprep.mubr.f32.mxu0 0.0
        %296 = vmatmul.mubr.f32.gmra.mrb[0].mxu0 %v222
        %v297 = vpop.f32.mrb[0].mxu0
        %v298 = vadd.f32 0.0, %v297
        %v299 = vpop.f32.mrb[0].mxu0
        %v300 = vadd.f32 0.0, %v299
        %301 = vdwg.mxu0
        %302 = vmatprep.subr.mxu0 0.0
        %303 = vmatpush1.msra.mxu0 %v229
        %304 = vmatprep.subr.mxu0 0.0
        %305 = vmatpush1.msra.mxu0 0.0
        %306 = vmatprep.subr.mxu0 0.0
        %307 = vmatpush1.msra.mxu0 0.0
        %308 = vmatprep.subr.mxu0 0.0
        %309 = vmatpush1.msra.mxu0 0.0
        %310 = vmatprep.subr.mxu0 0.0
        %311 = vmatpush1.msra.mxu0 0.0
        %312 = vmatprep.subr.mxu0 0.0
        %313 = vmatpush1.msra.mxu0 0.0
        %314 = vmatprep.subr.mxu0 0.0
        %315 = vmatpush1.msra.mxu0 0.0
        %316 = vmatprep.subr.mxu0 0.0
        %317 = vmatpush1.msra.mxu0 0.0
        %318 = vmatprep.subr.mxu0 0.0
        %319 = vmatpush1.msra.mxu0 0.0
        %320 = vmatprep.subr.mxu0 0.0
        %321 = vmatpush1.msra.mxu0 0.0
        %322 = vmatprep.subr.mxu0 0.0
        %323 = vmatpush1.msra.mxu0 0.0
        %324 = vmatprep.subr.mxu0 0.0
        %325 = vmatpush1.msra.mxu0 0.0
        %326 = vmatprep.subr.mxu0 0.0
        %327 = vmatpush1.msra.mxu0 0.0
        %328 = vmatprep.subr.mxu0 0.0
        %329 = vmatpush1.msra.mxu0 0.0
        %330 = vmatprep.subr.mxu0 0.0
        %331 = vmatpush1.msra.mxu0 0.0
        %332 = vmatprep.subr.mxu0 0.0
        %333 = vmatpush1.msra.mxu0 0.0
        %334 = vmatprep.subr.mxu0 0.0
        %335 = vmatpush1.msra.mxu0 0.0
        %336 = vmatprep.subr.mxu0 0.0
        %337 = vmatpush1.msra.mxu0 0.0
        %338 = vmatprep.subr.mxu0 0.0
        %339 = vmatpush1.msra.mxu0 0.0
        %340 = vmatprep.subr.mxu0 0.0
        %341 = vmatpush1.msra.mxu0 0.0
        %342 = vmatprep.subr.mxu0 0.0
        %343 = vmatpush1.msra.mxu0 0.0
        %344 = vmatprep.subr.mxu0 0.0
        %345 = vmatpush1.msra.mxu0 0.0
        %346 = vmatprep.subr.mxu0 0.0
        %347 = vmatpush1.msra.mxu0 0.0
        %348 = vmatprep.subr.mxu0 0.0
        %349 = vmatpush1.msra.mxu0 0.0
        %350 = vmatprep.subr.mxu0 0.0
        %351 = vmatpush1.msra.mxu0 0.0
        %352 = vmatprep.subr.mxu0 0.0
        %353 = vmatpush1.msra.mxu0 0.0
        %354 = vmatprep.subr.mxu0 0.0
        %355 = vmatpush1.msra.mxu0 0.0
        %356 = vmatprep.subr.mxu0 0.0
        %357 = vmatpush1.msra.mxu0 0.0
        %358 = vmatprep.subr.mxu0 0.0
        %359 = vmatpush1.msra.mxu0 0.0
        %360 = vmatprep.subr.mxu0 0.0
        %361 = vmatpush1.msra.mxu0 0.0
        %362 = vmatprep.subr.mxu0 0.0
        %363 = vmatpush1.msra.mxu0 0.0
        %364 = vmatprep.subr.mxu0 0.0
        %365 = vmatpush1.msra.mxu0 0.0
        %366 = vmatprep.mubr.f32.mxu0 0.0
        %367 = vmatmul.mubr.f32.gmra.mrb[0].mxu0 %v222
        %v368 = vpop.f32.mrb[0].mxu0
        %v369 = vadd.f32 0.0, %v368
        %v370 = vpop.f32.mrb[0].mxu0
        %371 = vdwg.mxu0
        %v374 = vsel %vm220, %v198, 0
        %v376 = vsel %vm224, %v196, 0
        %v378 = vsel %vm224, %v206, 0
        %v380 = vsel %vm224, %v197, 0
        %382 = vmatprep.subr.mxu0 %v378
        %383 = vmatpush1.msra.mxu0 %v376
        %384 = vmatprep.subr.mxu0 0.0
        %385 = vmatpush1.msra.mxu0 0.0
        %386 = vmatprep.subr.mxu0 0.0
        %387 = vmatpush1.msra.mxu0 0.0
        %388 = vmatprep.subr.mxu0 0.0
        %389 = vmatpush1.msra.mxu0 0.0
        %390 = vmatprep.subr.mxu0 0.0
        %391 = vmatpush1.msra.mxu0 0.0
        %392 = vmatprep.subr.mxu0 0.0
        %393 = vmatpush1.msra.mxu0 0.0
        %394 = vmatprep.subr.mxu0 0.0
        %395 = vmatpush1.msra.mxu0 0.0
        %396 = vmatprep.subr.mxu0 0.0
        %397 = vmatpush1.msra.mxu0 0.0
        %398 = vmatprep.subr.mxu0 0.0
        %399 = vmatpush1.msra.mxu0 0.0
        %400 = vmatprep.subr.mxu0 0.0
        %401 = vmatpush1.msra.mxu0 0.0
        %402 = vmatprep.subr.mxu0 0.0
        %403 = vmatpush1.msra.mxu0 0.0
        %404 = vmatprep.subr.mxu0 0.0
        %405 = vmatpush1.msra.mxu0 0.0
        %406 = vmatprep.subr.mxu0 0.0
        %407 = vmatpush1.msra.mxu0 0.0
        %408 = vmatprep.subr.mxu0 0.0
        %409 = vmatpush1.msra.mxu0 0.0
        %410 = vmatprep.subr.mxu0 0.0
        %411 = vmatpush1.msra.mxu0 0.0
        %412 = vmatprep.subr.mxu0 0.0
        %413 = vmatpush1.msra.mxu0 0.0
        %414 = vmatprep.subr.mxu0 0.0
        %415 = vmatpush1.msra.mxu0 0.0
        %416 = vmatprep.subr.mxu0 0.0
        %417 = vmatpush1.msra.mxu0 0.0
        %418 = vmatprep.subr.mxu0 0.0
        %419 = vmatpush1.msra.mxu0 0.0
        %420 = vmatprep.subr.mxu0 0.0
        %421 = vmatpush1.msra.mxu0 0.0
        %422 = vmatprep.subr.mxu0 0.0
        %423 = vmatpush1.msra.mxu0 0.0
        %424 = vmatprep.subr.mxu0 0.0
        %425 = vmatpush1.msra.mxu0 0.0
        %426 = vmatprep.subr.mxu0 0.0
        %427 = vmatpush1.msra.mxu0 0.0
        %428 = vmatprep.subr.mxu0 0.0
        %429 = vmatpush1.msra.mxu0 0.0
        %430 = vmatprep.subr.mxu0 0.0
        %431 = vmatpush1.msra.mxu0 0.0
        %432 = vmatprep.subr.mxu0 0.0
        %433 = vmatpush1.msra.mxu0 0.0
        %434 = vmatprep.subr.mxu0 0.0
        %435 = vmatpush1.msra.mxu0 0.0
        %436 = vmatprep.subr.mxu0 0.0
        %437 = vmatpush1.msra.mxu0 0.0
        %438 = vmatprep.subr.mxu0 0.0
        %439 = vmatpush1.msra.mxu0 0.0
        %440 = vmatprep.subr.mxu0 0.0
        %441 = vmatpush1.msra.mxu0 0.0
        %442 = vmatprep.subr.mxu0 0.0
        %443 = vmatpush1.msra.mxu0 0.0
        %444 = vmatprep.subr.mxu0 0.0
        %445 = vmatpush1.msra.mxu0 0.0
        %446 = vmatprep.mubr.f32.mxu0 0.0
        %447 = vmatmul.mubr.f32.gmra.mrb[0].mxu0 %v374
        %v448 = vpop.f32.mrb[0].mxu0
        %v449 = vadd.f32 %v298, %v448
        %v450 = vpop.f32.mrb[0].mxu0
        %v451 = vadd.f32 %v300, %v450
        %452 = vdwg.mxu0
        %453 = vmatprep.subr.mxu0 0.0
        %454 = vmatpush1.msra.mxu0 %v380
        %455 = vmatprep.subr.mxu0 0.0
        %456 = vmatpush1.msra.mxu0 0.0
        %457 = vmatprep.subr.mxu0 0.0
        %458 = vmatpush1.msra.mxu0 0.0
        %459 = vmatprep.subr.mxu0 0.0
        %460 = vmatpush1.msra.mxu0 0.0
        %461 = vmatprep.subr.mxu0 0.0
        %462 = vmatpush1.msra.mxu0 0.0
        %463 = vmatprep.subr.mxu0 0.0
        %464 = vmatpush1.msra.mxu0 0.0
        %465 = vmatprep.subr.mxu0 0.0
        %466 = vmatpush1.msra.mxu0 0.0
        %467 = vmatprep.subr.mxu0 0.0
        %468 = vmatpush1.msra.mxu0 0.0
        %469 = vmatprep.subr.mxu0 0.0
        %470 = vmatpush1.msra.mxu0 0.0
        %471 = vmatprep.subr.mxu0 0.0
        %472 = vmatpush1.msra.mxu0 0.0
        %473 = vmatprep.subr.mxu0 0.0
        %474 = vmatpush1.msra.mxu0 0.0
        %475 = vmatprep.subr.mxu0 0.0
        %476 = vmatpush1.msra.mxu0 0.0
        %477 = vmatprep.subr.mxu0 0.0
        %478 = vmatpush1.msra.mxu0 0.0
        %479 = vmatprep.subr.mxu0 0.0
        %480 = vmatpush1.msra.mxu0 0.0
        %481 = vmatprep.subr.mxu0 0.0
        %482 = vmatpush1.msra.mxu0 0.0
        %483 = vmatprep.subr.mxu0 0.0
        %484 = vmatpush1.msra.mxu0 0.0
        %485 = vmatprep.subr.mxu0 0.0
        %486 = vmatpush1.msra.mxu0 0.0
        %487 = vmatprep.subr.mxu0 0.0
        %488 = vmatpush1.msra.mxu0 0.0
        %489 = vmatprep.subr.mxu0 0.0
        %490 = vmatpush1.msra.mxu0 0.0
        %491 = vmatprep.subr.mxu0 0.0
        %492 = vmatpush1.msra.mxu0 0.0
        %493 = vmatprep.subr.mxu0 0.0
        %494 = vmatpush1.msra.mxu0 0.0
        %495 = vmatprep.subr.mxu0 0.0
        %496 = vmatpush1.msra.mxu0 0.0
        %497 = vmatprep.subr.mxu0 0.0
        %498 = vmatpush1.msra.mxu0 0.0
        %499 = vmatprep.subr.mxu0 0.0
        %500 = vmatpush1.msra.mxu0 0.0
        %501 = vmatprep.subr.mxu0 0.0
        %502 = vmatpush1.msra.mxu0 0.0
        %503 = vmatprep.subr.mxu0 0.0
        %504 = vmatpush1.msra.mxu0 0.0
        %505 = vmatprep.subr.mxu0 0.0
        %506 = vmatpush1.msra.mxu0 0.0
        %507 = vmatprep.subr.mxu0 0.0
        %508 = vmatpush1.msra.mxu0 0.0
        %509 = vmatprep.subr.mxu0 0.0
        %510 = vmatpush1.msra.mxu0 0.0
        %511 = vmatprep.subr.mxu0 0.0
        %512 = vmatpush1.msra.mxu0 0.0
        %513 = vmatprep.subr.mxu0 0.0
        %514 = vmatpush1.msra.mxu0 0.0
        %515 = vmatprep.subr.mxu0 0.0
        %516 = vmatpush1.msra.mxu0 0.0
        %517 = vmatprep.mubr.f32.mxu0 0.0
        %518 = vmatmul.mubr.f32.gmra.mrb[0].mxu0 %v374
        %v519 = vpop.f32.mrb[0].mxu0
        %v520 = vadd.f32 %v369, %v519
        %v521 = vpop.f32.mrb[0].mxu0
        %522 = vdwg.mxu0
        %v523 = vmul.f32 %v201, %v201
        %526 = vrot.lane.b32.xlu0 %v199, 127
        %v527 = vpop.permute.xlu0 %526
        %528 = vrot.lane.b32.xlu0 %v523, 127
        %v529 = vpop.permute.xlu0 %528
        %v530 = vrot.slane %v527, 4
        %v531 = vrot.slane %v529, 4
        %v532 = vsel %vm224, %v530, %v531
        %v533 = vsel %vm216, %v527, %v532
        %v534 = vsel %vm216, %v529, %v531
        %v537 = vadd.f32 %v199, %v533
        %v538 = vadd.f32 %v200, %v534
        %v539 = vld [vmem:[%s195] sm:$0xff]
        %v540 = vld [vmem:[%s195 + $0x8] sm:$0xff]
        %s541 = scalar_lea.vmem %s1, 16
        %v542 = vld [vmem:[%s541] sm:$0xff]
        %v545 = vcombine.high %v539, %v539
        %v546 = vcombine.high %v540, %v540
        %547 = vrot.lane.b32.xlu0 %v539, 126
        %v548 = vpop.permute.xlu0 %547
        %549 = vrot.lane.b32.xlu0 %v545, 126
        %v550 = vpop.permute.xlu0 %549
        %551 = vrot.lane.b32.xlu0 %v540, 126
        %v552 = vpop.permute.xlu0 %551
        %553 = vrot.lane.b32.xlu0 %v546, 126
        %v554 = vpop.permute.xlu0 %553
        %vm555 = vcmask 1031168
        %v556 = vsel %vm555, %v548, %v550
        %v557 = vsel %vm555, %v550, %v552
        %v558 = vsel %vm555, %v552, %v554
        %v560 = vsel %vm220, %v542, 0
        %v562 = vsel %vm224, %v556, 0
        %v564 = vsel %vm224, %v557, 0
        %v566 = vsel %vm224, %v558, 0
        %568 = vmatprep.subr.mxu0 %v564
        %569 = vmatpush1.msra.mxu0 %v562
        %570 = vmatprep.subr.mxu0 0.0
        %571 = vmatpush1.msra.mxu0 0.0
        %572 = vmatprep.subr.mxu0 0.0
        %573 = vmatpush1.msra.mxu0 0.0
        %574 = vmatprep.subr.mxu0 0.0
        %575 = vmatpush1.msra.mxu0 0.0
        %576 = vmatprep.subr.mxu0 0.0
        %577 = vmatpush1.msra.mxu0 0.0
        %578 = vmatprep.subr.mxu0 0.0
        %579 = vmatpush1.msra.mxu0 0.0
        %580 = vmatprep.subr.mxu0 0.0
        %581 = vmatpush1.msra.mxu0 0.0
        %582 = vmatprep.subr.mxu0 0.0
        %583 = vmatpush1.msra.mxu0 0.0
        %584 = vmatprep.subr.mxu0 0.0
        %585 = vmatpush1.msra.mxu0 0.0
        %586 = vmatprep.subr.mxu0 0.0
        %587 = vmatpush1.msra.mxu0 0.0
        %588 = vmatprep.subr.mxu0 0.0
        %589 = vmatpush1.msra.mxu0 0.0
        %590 = vmatprep.subr.mxu0 0.0
        %591 = vmatpush1.msra.mxu0 0.0
        %592 = vmatprep.subr.mxu0 0.0
        %593 = vmatpush1.msra.mxu0 0.0
        %594 = vmatprep.subr.mxu0 0.0
        %595 = vmatpush1.msra.mxu0 0.0
        %596 = vmatprep.subr.mxu0 0.0
        %597 = vmatpush1.msra.mxu0 0.0
        %598 = vmatprep.subr.mxu0 0.0
        %599 = vmatpush1.msra.mxu0 0.0
        %600 = vmatprep.subr.mxu0 0.0
        %601 = vmatpush1.msra.mxu0 0.0
        %602 = vmatprep.subr.mxu0 0.0
        %603 = vmatpush1.msra.mxu0 0.0
        %604 = vmatprep.subr.mxu0 0.0
        %605 = vmatpush1.msra.mxu0 0.0
        %606 = vmatprep.subr.mxu0 0.0
        %607 = vmatpush1.msra.mxu0 0.0
        %608 = vmatprep.subr.mxu0 0.0
        %609 = vmatpush1.msra.mxu0 0.0
        %610 = vmatprep.subr.mxu0 0.0
        %611 = vmatpush1.msra.mxu0 0.0
        %612 = vmatprep.subr.mxu0 0.0
        %613 = vmatpush1.msra.mxu0 0.0
        %614 = vmatprep.subr.mxu0 0.0
        %615 = vmatpush1.msra.mxu0 0.0
        %616 = vmatprep.subr.mxu0 0.0
        %617 = vmatpush1.msra.mxu0 0.0
        %618 = vmatprep.subr.mxu0 0.0
        %619 = vmatpush1.msra.mxu0 0.0
        %620 = vmatprep.subr.mxu0 0.0
        %621 = vmatpush1.msra.mxu0 0.0
        %622 = vmatprep.subr.mxu0 0.0
        %623 = vmatpush1.msra.mxu0 0.0
        %624 = vmatprep.subr.mxu0 0.0
        %625 = vmatpush1.msra.mxu0 0.0
        %626 = vmatprep.subr.mxu0 0.0
        %627 = vmatpush1.msra.mxu0 0.0
        %628 = vmatprep.subr.mxu0 0.0
        %629 = vmatpush1.msra.mxu0 0.0
        %630 = vmatprep.subr.mxu0 0.0
        %631 = vmatpush1.msra.mxu0 0.0
        %632 = vmatprep.mubr.f32.mxu0 0.0
        %633 = vmatmul.mubr.f32.gmra.mrb[0].mxu0 %v560
        %v634 = vpop.f32.mrb[0].mxu0
        %v635 = vadd.f32 0.0, %v634
        %v636 = vpop.f32.mrb[0].mxu0
        %v637 = vadd.f32 0.0, %v636
        %638 = vdwg.mxu0
        %639 = vmatprep.subr.mxu0 0.0
        %640 = vmatpush1.msra.mxu0 %v566
        %641 = vmatprep.subr.mxu0 0.0
        %642 = vmatpush1.msra.mxu0 0.0
        %643 = vmatprep.subr.mxu0 0.0
        %644 = vmatpush1.msra.mxu0 0.0
        %645 = vmatprep.subr.mxu0 0.0
        %646 = vmatpush1.msra.mxu0 0.0
        %647 = vmatprep.subr.mxu0 0.0
        %648 = vmatpush1.msra.mxu0 0.0
        %649 = vmatprep.subr.mxu0 0.0
        %650 = vmatpush1.msra.mxu0 0.0
        %651 = vmatprep.subr.mxu0 0.0
        %652 = vmatpush1.msra.mxu0 0.0
        %653 = vmatprep.subr.mxu0 0.0
        %654 = vmatpush1.msra.mxu0 0.0
        %655 = vmatprep.subr.mxu0 0.0
        %656 = vmatpush1.msra.mxu0 0.0
        %657 = vmatprep.subr.mxu0 0.0
        %658 = vmatpush1.msra.mxu0 0.0
        %659 = vmatprep.subr.mxu0 0.0
        %660 = vmatpush1.msra.mxu0 0.0
        %661 = vmatprep.subr.mxu0 0.0
        %662 = vmatpush1.msra.mxu0 0.0
        %663 = vmatprep.subr.mxu0 0.0
        %664 = vmatpush1.msra.mxu0 0.0
        %665 = vmatprep.subr.mxu0 0.0
        %666 = vmatpush1.msra.mxu0 0.0
        %667 = vmatprep.subr.mxu0 0.0
        %668 = vmatpush1.msra.mxu0 0.0
        %669 = vmatprep.subr.mxu0 0.0
        %670 = vmatpush1.msra.mxu0 0.0
        %671 = vmatprep.subr.mxu0 0.0
        %672 = vmatpush1.msra.mxu0 0.0
        %673 = vmatprep.subr.mxu0 0.0
        %674 = vmatpush1.msra.mxu0 0.0
        %675 = vmatprep.subr.mxu0 0.0
        %676 = vmatpush1.msra.mxu0 0.0
        %677 = vmatprep.subr.mxu0 0.0
        %678 = vmatpush1.msra.mxu0 0.0
        %679 = vmatprep.subr.mxu0 0.0
        %680 = vmatpush1.msra.mxu0 0.0
        %681 = vmatprep.subr.mxu0 0.0
        %682 = vmatpush1.msra.mxu0 0.0
        %683 = vmatprep.subr.mxu0 0.0
        %684 = vmatpush1.msra.mxu0 0.0
        %685 = vmatprep.subr.mxu0 0.0
        %686 = vmatpush1.msra.mxu0 0.0
        %687 = vmatprep.subr.mxu0 0.0
        %688 = vmatpush1.msra.mxu0 0.0
        %689 = vmatprep.subr.mxu0 0.0
        %690 = vmatpush1.msra.mxu0 0.0
        %691 = vmatprep.subr.mxu0 0.0
        %692 = vmatpush1.msra.mxu0 0.0
        %693 = vmatprep.subr.mxu0 0.0
        %694 = vmatpush1.msra.mxu0 0.0
        %695 = vmatprep.subr.mxu0 0.0
        %696 = vmatpush1.msra.mxu0 0.0
        %697 = vmatprep.subr.mxu0 0.0
        %698 = vmatpush1.msra.mxu0 0.0
        %699 = vmatprep.subr.mxu0 0.0
        %700 = vmatpush1.msra.mxu0 0.0
        %701 = vmatprep.subr.mxu0 0.0
        %702 = vmatpush1.msra.mxu0 0.0
        %703 = vmatprep.mubr.f32.mxu0 0.0
        %704 = vmatmul.mubr.f32.gmra.mrb[0].mxu0 %v560
        %v705 = vpop.f32.mrb[0].mxu0
        %v706 = vadd.f32 0.0, %v705
        %v707 = vpop.f32.mrb[0].mxu0
        %708 = vdwg.mxu0
        %v709 = vadd.f32 %v449, %v635
        %v710 = vadd.f32 %v451, %v637
        %v711 = vadd.f32 %v520, %v706
        %v712 = vmul.f32 %v539, %v539
        %v713 = vmul.f32 %v540, %v540
        %716 = vrot.lane.b32.xlu0 %v712, 126
        %v717 = vpop.permute.xlu0 %716
        %718 = vrot.lane.b32.xlu0 %v713, 126
        %v719 = vpop.permute.xlu0 %718
        %v720 = vrot.slane %v717, 4
        %v721 = vrot.slane %v719, 4
        %v722 = vsel %vm224, %v720, %v721
        %v723 = vsel %vm555, %v717, %v722
        %v724 = vsel %vm555, %v719, %v721
        %v727 = vadd.f32 %v537, %v723
        %v728 = vadd.f32 %v538, %v724
        %v729 = vld [vmem:[%s195] sm:$0xff]
        %v730 = vld [vmem:[%s195 + $0x8] sm:$0xff]
        %s731 = scalar_lea.vmem %s1, 24
        %v732 = vld [vmem:[%s731] sm:$0xff]
        %v735 = vcombine.high %v729, %v729
        %v736 = vcombine.high %v730, %v730
        %737 = vrot.lane.b32.xlu0 %v729, 110
        %v738 = vpop.permute.xlu0 %737
        %739 = vrot.lane.b32.xlu0 %v735, 110
        %v740 = vpop.permute.xlu0 %739
        %741 = vrot.lane.b32.xlu0 %v730, 110
        %v742 = vpop.permute.xlu0 %741
        %743 = vrot.lane.b32.xlu0 %v736, 110
        %v744 = vpop.permute.xlu0 %743
        %vm745 = vcmask 900096
        %v746 = vsel %vm745, %v738, %v740
        %v747 = vsel %vm745, %v740, %v742
        %v748 = vsel %vm745, %v742, %v744
        %v750 = vsel %vm220, %v732, 0
        %v752 = vsel %vm224, %v746, 0
        %v754 = vsel %vm224, %v747, 0
        %v756 = vsel %vm224, %v748, 0
        %758 = vmatprep.subr.mxu0 %v754
        %759 = vmatpush1.msra.mxu0 %v752
        %760 = vmatprep.subr.mxu0 0.0
        %761 = vmatpush1.msra.mxu0 0.0
        %762 = vmatprep.subr.mxu0 0.0
        %763 = vmatpush1.msra.mxu0 0.0
        %764 = vmatprep.subr.mxu0 0.0
        %765 = vmatpush1.msra.mxu0 0.0
        %766 = vmatprep.subr.mxu0 0.0
        %767 = vmatpush1.msra.mxu0 0.0
        %768 = vmatprep.subr.mxu0 0.0
        %769 = vmatpush1.msra.mxu0 0.0
        %770 = vmatprep.subr.mxu0 0.0
        %771 = vmatpush1.msra.mxu0 0.0
        %772 = vmatprep.subr.mxu0 0.0
        %773 = vmatpush1.msra.mxu0 0.0
        %774 = vmatprep.subr.mxu0 0.0
        %775 = vmatpush1.msra.mxu0 0.0
        %776 = vmatprep.subr.mxu0 0.0
        %777 = vmatpush1.msra.mxu0 0.0
        %778 = vmatprep.subr.mxu0 0.0
        %779 = vmatpush1.msra.mxu0 0.0
        %780 = vmatprep.subr.mxu0 0.0
        %781 = vmatpush1.msra.mxu0 0.0
        %782 = vmatprep.subr.mxu0 0.0
        %783 = vmatpush1.msra.mxu0 0.0
        %784 = vmatprep.subr.mxu0 0.0
        %785 = vmatpush1.msra.mxu0 0.0
        %786 = vmatprep.subr.mxu0 0.0
        %787 = vmatpush1.msra.mxu0 0.0
        %788 = vmatprep.subr.mxu0 0.0
        %789 = vmatpush1.msra.mxu0 0.0
        %790 = vmatprep.subr.mxu0 0.0
        %791 = vmatpush1.msra.mxu0 0.0
        %792 = vmatprep.subr.mxu0 0.0
        %793 = vmatpush1.msra.mxu0 0.0
        %794 = vmatprep.subr.mxu0 0.0
        %795 = vmatpush1.msra.mxu0 0.0
        %796 = vmatprep.subr.mxu0 0.0
        %797 = vmatpush1.msra.mxu0 0.0
        %798 = vmatprep.subr.mxu0 0.0
        %799 = vmatpush1.msra.mxu0 0.0
        %800 = vmatprep.subr.mxu0 0.0
        %801 = vmatpush1.msra.mxu0 0.0
        %802 = vmatprep.subr.mxu0 0.0
        %803 = vmatpush1.msra.mxu0 0.0
        %804 = vmatprep.subr.mxu0 0.0
        %805 = vmatpush1.msra.mxu0 0.0
        %806 = vmatprep.subr.mxu0 0.0
        %807 = vmatpush1.msra.mxu0 0.0
        %808 = vmatprep.subr.mxu0 0.0
        %809 = vmatpush1.msra.mxu0 0.0
        %810 = vmatprep.subr.mxu0 0.0
        %811 = vmatpush1.msra.mxu0 0.0
        %812 = vmatprep.subr.mxu0 0.0
        %813 = vmatpush1.msra.mxu0 0.0
        %814 = vmatprep.subr.mxu0 0.0
        %815 = vmatpush1.msra.mxu0 0.0
        %816 = vmatprep.subr.mxu0 0.0
        %817 = vmatpush1.msra.mxu0 0.0
        %818 = vmatprep.subr.mxu0 0.0
        %819 = vmatpush1.msra.mxu0 0.0
        %820 = vmatprep.subr.mxu0 0.0
        %821 = vmatpush1.msra.mxu0 0.0
        %822 = vmatprep.mubr.f32.mxu0 0.0
        %823 = vmatmul.mubr.f32.gmra.mrb[0].mxu0 %v750
        %v824 = vpop.f32.mrb[0].mxu0
        %v825 = vadd.f32 0.0, %v824
        %v826 = vpop.f32.mrb[0].mxu0
        %v827 = vadd.f32 0.0, %v826
        %828 = vdwg.mxu0
        %829 = vmatprep.subr.mxu0 0.0
        %830 = vmatpush1.msra.mxu0 %v756
        %831 = vmatprep.subr.mxu0 0.0
        %832 = vmatpush1.msra.mxu0 0.0
        %833 = vmatprep.subr.mxu0 0.0
        %834 = vmatpush1.msra.mxu0 0.0
        %835 = vmatprep.subr.mxu0 0.0
        %836 = vmatpush1.msra.mxu0 0.0
        %837 = vmatprep.subr.mxu0 0.0
        %838 = vmatpush1.msra.mxu0 0.0
        %839 = vmatprep.subr.mxu0 0.0
        %840 = vmatpush1.msra.mxu0 0.0
        %841 = vmatprep.subr.mxu0 0.0
        %842 = vmatpush1.msra.mxu0 0.0
        %843 = vmatprep.subr.mxu0 0.0
        %844 = vmatpush1.msra.mxu0 0.0
        %845 = vmatprep.subr.mxu0 0.0
        %846 = vmatpush1.msra.mxu0 0.0
        %847 = vmatprep.subr.mxu0 0.0
        %848 = vmatpush1.msra.mxu0 0.0
        %849 = vmatprep.subr.mxu0 0.0
        %850 = vmatpush1.msra.mxu0 0.0
        %851 = vmatprep.subr.mxu0 0.0
        %852 = vmatpush1.msra.mxu0 0.0
        %853 = vmatprep.subr.mxu0 0.0
        %854 = vmatpush1.msra.mxu0 0.0
        %855 = vmatprep.subr.mxu0 0.0
        %856 = vmatpush1.msra.mxu0 0.0
        %857 = vmatprep.subr.mxu0 0.0
        %858 = vmatpush1.msra.mxu0 0.0
        %859 = vmatprep.subr.mxu0 0.0
        %860 = vmatpush1.msra.mxu0 0.0
        %861 = vmatprep.subr.mxu0 0.0
        %862 = vmatpush1.msra.mxu0 0.0
        %863 = vmatprep.subr.mxu0 0.0
        %864 = vmatpush1.msra.mxu0 0.0
        %865 = vmatprep.subr.mxu0 0.0
        %866 = vmatpush1.msra.mxu0 0.0
        %867 = vmatprep.subr.mxu0 0.0
        %868 = vmatpush1.msra.mxu0 0.0
        %869 = vmatprep.subr.mxu0 0.0
        %870 = vmatpush1.msra.mxu0 0.0
        %871 = vmatprep.subr.mxu0 0.0
        %872 = vmatpush1.msra.mxu0 0.0
        %873 = vmatprep.subr.mxu0 0.0
        %874 = vmatpush1.msra.mxu0 0.0
        %875 = vmatprep.subr.mxu0 0.0
        %876 = vmatpush1.msra.mxu0 0.0
        %877 = vmatprep.subr.mxu0 0.0
        %878 = vmatpush1.msra.mxu0 0.0
        %879 = vmatprep.subr.mxu0 0.0
        %880 = vmatpush1.msra.mxu0 0.0
        %881 = vmatprep.subr.mxu0 0.0
        %882 = vmatpush1.msra.mxu0 0.0
        %883 = vmatprep.subr.mxu0 0.0
        %884 = vmatpush1.msra.mxu0 0.0
        %885 = vmatprep.subr.mxu0 0.0
        %886 = vmatpush1.msra.mxu0 0.0
        %887 = vmatprep.subr.mxu0 0.0
        %888 = vmatpush1.msra.mxu0 0.0
        %889 = vmatprep.subr.mxu0 0.0
        %890 = vmatpush1.msra.mxu0 0.0
        %891 = vmatprep.subr.mxu0 0.0
        %892 = vmatpush1.msra.mxu0 0.0
        %893 = vmatprep.mubr.f32.mxu0 0.0
        %894 = vmatmul.mubr.f32.gmra.mrb[0].mxu0 %v750
        %v895 = vpop.f32.mrb[0].mxu0
        %v896 = vadd.f32 0.0, %v895
        %v897 = vpop.f32.mrb[0].mxu0
        %898 = vdwg.mxu0
        %v899 = vadd.f32 %v709, %v825
        %v900 = vadd.f32 %v710, %v827
        %v901 = vadd.f32 %v711, %v896
        %v902 = vmul.f32 %v729, %v729
        %v903 = vmul.f32 %v730, %v730
        %906 = vrot.lane.b32.xlu0 %v902, 110
        %v907 = vpop.permute.xlu0 %906
        %908 = vrot.lane.b32.xlu0 %v903, 110
        %v909 = vpop.permute.xlu0 %908
        %v910 = vrot.slane %v907, 4
        %v911 = vrot.slane %v909, 4
        %v912 = vsel %vm224, %v910, %v911
        %v913 = vsel %vm745, %v907, %v912
        %v914 = vsel %vm745, %v909, %v911
        %v917 = vadd.f32 %v727, %v913
        %v918 = vadd.f32 %v728, %v914
        %v919 = vld [vmem:[%s195] sm:$0xff]
        %v920 = vld [vmem:[%s195 + $0x8] sm:$0xff]
        %s921 = scalar_lea.vmem %s1, 32
        %v922 = vld [vmem:[%s921] sm:$0xff]
        %v925 = vcombine.high %v919, %v919
        %v926 = vcombine.high %v920, %v920
        %927 = vrot.lane.b32.xlu0 %v919, 109
        %v928 = vpop.permute.xlu0 %927
        %929 = vrot.lane.b32.xlu0 %v925, 109
        %v930 = vpop.permute.xlu0 %929
        %931 = vrot.lane.b32.xlu0 %v920, 109
        %v932 = vpop.permute.xlu0 %931
        %933 = vrot.lane.b32.xlu0 %v926, 109
        %v934 = vpop.permute.xlu0 %933
        %vm935 = vcmask 891904
        %v936 = vsel %vm935, %v928, %v930
        %v937 = vsel %vm935, %v930, %v932
        %v938 = vsel %vm935, %v932, %v934
        %v940 = vsel %vm220, %v922, 0
        %v942 = vsel %vm224, %v936, 0
        %v944 = vsel %vm224, %v937, 0
        %v946 = vsel %vm224, %v938, 0
        %948 = vmatprep.subr.mxu0 %v944
        %949 = vmatpush1.msra.mxu0 %v942
        %950 = vmatprep.subr.mxu0 0.0
        %951 = vmatpush1.msra.mxu0 0.0
        %952 = vmatprep.subr.mxu0 0.0
        %953 = vmatpush1.msra.mxu0 0.0
        %954 = vmatprep.subr.mxu0 0.0
        %955 = vmatpush1.msra.mxu0 0.0
        %956 = vmatprep.subr.mxu0 0.0
        %957 = vmatpush1.msra.mxu0 0.0
        %958 = vmatprep.subr.mxu0 0.0
        %959 = vmatpush1.msra.mxu0 0.0
        %960 = vmatprep.subr.mxu0 0.0
        %961 = vmatpush1.msra.mxu0 0.0
        %962 = vmatprep.subr.mxu0 0.0
        %963 = vmatpush1.msra.mxu0 0.0
        %964 = vmatprep.subr.mxu0 0.0
        %965 = vmatpush1.msra.mxu0 0.0
        %966 = vmatprep.subr.mxu0 0.0
        %967 = vmatpush1.msra.mxu0 0.0
        %968 = vmatprep.subr.mxu0 0.0
        %969 = vmatpush1.msra.mxu0 0.0
        %970 = vmatprep.subr.mxu0 0.0
        %971 = vmatpush1.msra.mxu0 0.0
        %972 = vmatprep.subr.mxu0 0.0
        %973 = vmatpush1.msra.mxu0 0.0
        %974 = vmatprep.subr.mxu0 0.0
        %975 = vmatpush1.msra.mxu0 0.0
        %976 = vmatprep.subr.mxu0 0.0
        %977 = vmatpush1.msra.mxu0 0.0
        %978 = vmatprep.subr.mxu0 0.0
        %979 = vmatpush1.msra.mxu0 0.0
        %980 = vmatprep.subr.mxu0 0.0
        %981 = vmatpush1.msra.mxu0 0.0
        %982 = vmatprep.subr.mxu0 0.0
        %983 = vmatpush1.msra.mxu0 0.0
        %984 = vmatprep.subr.mxu0 0.0
        %985 = vmatpush1.msra.mxu0 0.0
        %986 = vmatprep.subr.mxu0 0.0
        %987 = vmatpush1.msra.mxu0 0.0
        %988 = vmatprep.subr.mxu0 0.0
        %989 = vmatpush1.msra.mxu0 0.0
        %990 = vmatprep.subr.mxu0 0.0
        %991 = vmatpush1.msra.mxu0 0.0
        %992 = vmatprep.subr.mxu0 0.0
        %993 = vmatpush1.msra.mxu0 0.0
        %994 = vmatprep.subr.mxu0 0.0
        %995 = vmatpush1.msra.mxu0 0.0
        %996 = vmatprep.subr.mxu0 0.0
        %997 = vmatpush1.msra.mxu0 0.0
        %998 = vmatprep.subr.mxu0 0.0
        %999 = vmatpush1.msra.mxu0 0.0
        %1000 = vmatprep.subr.mxu0 0.0
        %1001 = vmatpush1.msra.mxu0 0.0
        %1002 = vmatprep.subr.mxu0 0.0
        %1003 = vmatpush1.msra.mxu0 0.0
        %1004 = vmatprep.subr.mxu0 0.0
        %1005 = vmatpush1.msra.mxu0 0.0
        %1006 = vmatprep.subr.mxu0 0.0
        %1007 = vmatpush1.msra.mxu0 0.0
        %1008 = vmatprep.subr.mxu0 0.0
        %1009 = vmatpush1.msra.mxu0 0.0
        %1010 = vmatprep.subr.mxu0 0.0
        %1011 = vmatpush1.msra.mxu0 0.0
        %1012 = vmatprep.mubr.f32.mxu0 0.0
        %1013 = vmatmul.mubr.f32.gmra.mrb[0].mxu0 %v940
        %v1014 = vpop.f32.mrb[0].mxu0
        %v1015 = vadd.f32 0.0, %v1014
        %v1016 = vpop.f32.mrb[0].mxu0
        %v1017 = vadd.f32 0.0, %v1016
        %1018 = vdwg.mxu0
        %1019 = vmatprep.subr.mxu0 0.0
        %1020 = vmatpush1.msra.mxu0 %v946
        %1021 = vmatprep.subr.mxu0 0.0
        %1022 = vmatpush1.msra.mxu0 0.0
        %1023 = vmatprep.subr.mxu0 0.0
        %1024 = vmatpush1.msra.mxu0 0.0
        %1025 = vmatprep.subr.mxu0 0.0
        %1026 = vmatpush1.msra.mxu0 0.0
        %1027 = vmatprep.subr.mxu0 0.0
        %1028 = vmatpush1.msra.mxu0 0.0
        %1029 = vmatprep.subr.mxu0 0.0
        %1030 = vmatpush1.msra.mxu0 0.0
        %1031 = vmatprep.subr.mxu0 0.0
        %1032 = vmatpush1.msra.mxu0 0.0
        %1033 = vmatprep.subr.mxu0 0.0
        %1034 = vmatpush1.msra.mxu0 0.0
        %1035 = vmatprep.subr.mxu0 0.0
        %1036 = vmatpush1.msra.mxu0 0.0
        %1037 = vmatprep.subr.mxu0 0.0
        %1038 = vmatpush1.msra.mxu0 0.0
        %1039 = vmatprep.subr.mxu0 0.0
        %1040 = vmatpush1.msra.mxu0 0.0
        %1041 = vmatprep.subr.mxu0 0.0
        %1042 = vmatpush1.msra.mxu0 0.0
        %1043 = vmatprep.subr.mxu0 0.0
        %1044 = vmatpush1.msra.mxu0 0.0
        %1045 = vmatprep.subr.mxu0 0.0
        %1046 = vmatpush1.msra.mxu0 0.0
        %1047 = vmatprep.subr.mxu0 0.0
        %1048 = vmatpush1.msra.mxu0 0.0
        %1049 = vmatprep.subr.mxu0 0.0
        %1050 = vmatpush1.msra.mxu0 0.0
        %1051 = vmatprep.subr.mxu0 0.0
        %1052 = vmatpush1.msra.mxu0 0.0
        %1053 = vmatprep.subr.mxu0 0.0
        %1054 = vmatpush1.msra.mxu0 0.0
        %1055 = vmatprep.subr.mxu0 0.0
        %1056 = vmatpush1.msra.mxu0 0.0
        %1057 = vmatprep.subr.mxu0 0.0
        %1058 = vmatpush1.msra.mxu0 0.0
        %1059 = vmatprep.subr.mxu0 0.0
        %1060 = vmatpush1.msra.mxu0 0.0
        %1061 = vmatprep.subr.mxu0 0.0
        %1062 = vmatpush1.msra.mxu0 0.0
        %1063 = vmatprep.subr.mxu0 0.0
        %1064 = vmatpush1.msra.mxu0 0.0
        %1065 = vmatprep.subr.mxu0 0.0
        %1066 = vmatpush1.msra.mxu0 0.0
        %1067 = vmatprep.subr.mxu0 0.0
        %1068 = vmatpush1.msra.mxu0 0.0
        %1069 = vmatprep.subr.mxu0 0.0
        %1070 = vmatpush1.msra.mxu0 0.0
        %1071 = vmatprep.subr.mxu0 0.0
        %1072 = vmatpush1.msra.mxu0 0.0
        %1073 = vmatprep.subr.mxu0 0.0
        %1074 = vmatpush1.msra.mxu0 0.0
        %1075 = vmatprep.subr.mxu0 0.0
        %1076 = vmatpush1.msra.mxu0 0.0
        %1077 = vmatprep.subr.mxu0 0.0
        %1078 = vmatpush1.msra.mxu0 0.0
        %1079 = vmatprep.subr.mxu0 0.0
        %1080 = vmatpush1.msra.mxu0 0.0
        %1081 = vmatprep.subr.mxu0 0.0
        %1082 = vmatpush1.msra.mxu0 0.0
        %1083 = vmatprep.mubr.f32.mxu0 0.0
        %1084 = vmatmul.mubr.f32.gmra.mrb[0].mxu0 %v940
        %v1085 = vpop.f32.mrb[0].mxu0
        %v1086 = vadd.f32 0.0, %v1085
        %v1087 = vpop.f32.mrb[0].mxu0
        %1088 = vdwg.mxu0
        %v1089 = vadd.f32 %v899, %v1015
        %v1090 = vadd.f32 %v900, %v1017
        %v1091 = vadd.f32 %v901, %v1086
        %v1092 = vmul.f32 %v919, %v919
        %v1093 = vmul.f32 %v920, %v920
        %1096 = vrot.lane.b32.xlu0 %v1092, 109
        %v1097 = vpop.permute.xlu0 %1096
        %1098 = vrot.lane.b32.xlu0 %v1093, 109
        %v1099 = vpop.permute.xlu0 %1098
        %v1100 = vrot.slane %v1097, 4
        %v1101 = vrot.slane %v1099, 4
        %v1102 = vsel %vm224, %v1100, %v1101
        %v1103 = vsel %vm935, %v1097, %v1102
        %v1104 = vsel %vm935, %v1099, %v1101
        %v1107 = vadd.f32 %v917, %v1103
        %v1108 = vadd.f32 %v918, %v1104
        %v1109 = vld [vmem:[%s195] sm:$0xff]
        %v1110 = vld [vmem:[%s195 + $0x8] sm:$0xff]
        %s1111 = scalar_lea.vmem %s1, 40
        %v1112 = vld [vmem:[%s1111] sm:$0xff]
        %v1115 = vcombine.high %v1109, %v1109
        %v1116 = vcombine.high %v1110, %v1110
        %1117 = vrot.lane.b32.xlu0 %v1109, 108
        %v1118 = vpop.permute.xlu0 %1117
        %1119 = vrot.lane.b32.xlu0 %v1115, 108
        %v1120 = vpop.permute.xlu0 %1119
        %1121 = vrot.lane.b32.xlu0 %v1110, 108
        %v1122 = vpop.permute.xlu0 %1121
        %1123 = vrot.lane.b32.xlu0 %v1116, 108
        %v1124 = vpop.permute.xlu0 %1123
        %vm1125 = vcmask 883712
        %v1126 = vsel %vm1125, %v1118, %v1120
        %v1127 = vsel %vm1125, %v1120, %v1122
        %v1128 = vsel %vm1125, %v1122, %v1124
        %v1130 = vsel %vm220, %v1112, 0
        %v1132 = vsel %vm224, %v1126, 0
        %v1134 = vsel %vm224, %v1127, 0
        %v1136 = vsel %vm224, %v1128, 0
        %1138 = vmatprep.subr.mxu0 %v1134
        %1139 = vmatpush1.msra.mxu0 %v1132
        %1140 = vmatprep.subr.mxu0 0.0
        %1141 = vmatpush1.msra.mxu0 0.0
        %1142 = vmatprep.subr.mxu0 0.0
        %1143 = vmatpush1.msra.mxu0 0.0
        %1144 = vmatprep.subr.mxu0 0.0
        %1145 = vmatpush1.msra.mxu0 0.0
        %1146 = vmatprep.subr.mxu0 0.0
        %1147 = vmatpush1.msra.mxu0 0.0
        %1148 = vmatprep.subr.mxu0 0.0
        %1149 = vmatpush1.msra.mxu0 0.0
        %1150 = vmatprep.subr.mxu0 0.0
        %1151 = vmatpush1.msra.mxu0 0.0
        %1152 = vmatprep.subr.mxu0 0.0
        %1153 = vmatpush1.msra.mxu0 0.0
        %1154 = vmatprep.subr.mxu0 0.0
        %1155 = vmatpush1.msra.mxu0 0.0
        %1156 = vmatprep.subr.mxu0 0.0
        %1157 = vmatpush1.msra.mxu0 0.0
        %1158 = vmatprep.subr.mxu0 0.0
        %1159 = vmatpush1.msra.mxu0 0.0
        %1160 = vmatprep.subr.mxu0 0.0
        %1161 = vmatpush1.msra.mxu0 0.0
        %1162 = vmatprep.subr.mxu0 0.0
        %1163 = vmatpush1.msra.mxu0 0.0
        %1164 = vmatprep.subr.mxu0 0.0
        %1165 = vmatpush1.msra.mxu0 0.0
        %1166 = vmatprep.subr.mxu0 0.0
        %1167 = vmatpush1.msra.mxu0 0.0
        %1168 = vmatprep.subr.mxu0 0.0
        %1169 = vmatpush1.msra.mxu0 0.0
        %1170 = vmatprep.subr.mxu0 0.0
        %1171 = vmatpush1.msra.mxu0 0.0
        %1172 = vmatprep.subr.mxu0 0.0
        %1173 = vmatpush1.msra.mxu0 0.0
        %1174 = vmatprep.subr.mxu0 0.0
        %1175 = vmatpush1.msra.mxu0 0.0
        %1176 = vmatprep.subr.mxu0 0.0
        %1177 = vmatpush1.msra.mxu0 0.0
        %1178 = vmatprep.subr.mxu0 0.0
        %1179 = vmatpush1.msra.mxu0 0.0
        %1180 = vmatprep.subr.mxu0 0.0
        %1181 = vmatpush1.msra.mxu0 0.0
        %1182 = vmatprep.subr.mxu0 0.0
        %1183 = vmatpush1.msra.mxu0 0.0
        %1184 = vmatprep.subr.mxu0 0.0
        %1185 = vmatpush1.msra.mxu0 0.0
        %1186 = vmatprep.subr.mxu0 0.0
        %1187 = vmatpush1.msra.mxu0 0.0
        %1188 = vmatprep.subr.mxu0 0.0
        %1189 = vmatpush1.msra.mxu0 0.0
        %1190 = vmatprep.subr.mxu0 0.0
        %1191 = vmatpush1.msra.mxu0 0.0
        %1192 = vmatprep.subr.mxu0 0.0
        %1193 = vmatpush1.msra.mxu0 0.0
        %1194 = vmatprep.subr.mxu0 0.0
        %1195 = vmatpush1.msra.mxu0 0.0
        %1196 = vmatprep.subr.mxu0 0.0
        %1197 = vmatpush1.msra.mxu0 0.0
        %1198 = vmatprep.subr.mxu0 0.0
        %1199 = vmatpush1.msra.mxu0 0.0
        %1200 = vmatprep.subr.mxu0 0.0
        %1201 = vmatpush1.msra.mxu0 0.0
        %1202 = vmatprep.mubr.f32.mxu0 0.0
        %1203 = vmatmul.mubr.f32.gmra.mrb[0].mxu0 %v1130
        %v1204 = vpop.f32.mrb[0].mxu0
        %v1205 = vadd.f32 0.0, %v1204
        %v1206 = vpop.f32.mrb[0].mxu0
        %v1207 = vadd.f32 0.0, %v1206
        %1208 = vdwg.mxu0
        %1209 = vmatprep.subr.mxu0 0.0
        %1210 = vmatpush1.msra.mxu0 %v1136
        %1211 = vmatprep.subr.mxu0 0.0
        %1212 = vmatpush1.msra.mxu0 0.0
        %1213 = vmatprep.subr.mxu0 0.0
        %1214 = vmatpush1.msra.mxu0 0.0
        %1215 = vmatprep.subr.mxu0 0.0
        %1216 = vmatpush1.msra.mxu0 0.0
        %1217 = vmatprep.subr.mxu0 0.0
        %1218 = vmatpush1.msra.mxu0 0.0
        %1219 = vmatprep.subr.mxu0 0.0
        %1220 = vmatpush1.msra.mxu0 0.0
        %1221 = vmatprep.subr.mxu0 0.0
        %1222 = vmatpush1.msra.mxu0 0.0
        %1223 = vmatprep.subr.mxu0 0.0
        %1224 = vmatpush1.msra.mxu0 0.0
        %1225 = vmatprep.subr.mxu0 0.0
        %1226 = vmatpush1.msra.mxu0 0.0
        %1227 = vmatprep.subr.mxu0 0.0
        %1228 = vmatpush1.msra.mxu0 0.0
        %1229 = vmatprep.subr.mxu0 0.0
        %1230 = vmatpush1.msra.mxu0 0.0
        %1231 = vmatprep.subr.mxu0 0.0
        %1232 = vmatpush1.msra.mxu0 0.0
        %1233 = vmatprep.subr.mxu0 0.0
        %1234 = vmatpush1.msra.mxu0 0.0
        %1235 = vmatprep.subr.mxu0 0.0
        %1236 = vmatpush1.msra.mxu0 0.0
        %1237 = vmatprep.subr.mxu0 0.0
        %1238 = vmatpush1.msra.mxu0 0.0
        %1239 = vmatprep.subr.mxu0 0.0
        %1240 = vmatpush1.msra.mxu0 0.0
        %1241 = vmatprep.subr.mxu0 0.0
        %1242 = vmatpush1.msra.mxu0 0.0
        %1243 = vmatprep.subr.mxu0 0.0
        %1244 = vmatpush1.msra.mxu0 0.0
        %1245 = vmatprep.subr.mxu0 0.0
        %1246 = vmatpush1.msra.mxu0 0.0
        %1247 = vmatprep.subr.mxu0 0.0
        %1248 = vmatpush1.msra.mxu0 0.0
        %1249 = vmatprep.subr.mxu0 0.0
        %1250 = vmatpush1.msra.mxu0 0.0
        %1251 = vmatprep.subr.mxu0 0.0
        %1252 = vmatpush1.msra.mxu0 0.0
        %1253 = vmatprep.subr.mxu0 0.0
        %1254 = vmatpush1.msra.mxu0 0.0
        %1255 = vmatprep.subr.mxu0 0.0
        %1256 = vmatpush1.msra.mxu0 0.0
        %1257 = vmatprep.subr.mxu0 0.0
        %1258 = vmatpush1.msra.mxu0 0.0
        %1259 = vmatprep.subr.mxu0 0.0
        %1260 = vmatpush1.msra.mxu0 0.0
        %1261 = vmatprep.subr.mxu0 0.0
        %1262 = vmatpush1.msra.mxu0 0.0
        %1263 = vmatprep.subr.mxu0 0.0
        %1264 = vmatpush1.msra.mxu0 0.0
        %1265 = vmatprep.subr.mxu0 0.0
        %1266 = vmatpush1.msra.mxu0 0.0
        %1267 = vmatprep.subr.mxu0 0.0
        %1268 = vmatpush1.msra.mxu0 0.0
        %1269 = vmatprep.subr.mxu0 0.0
        %1270 = vmatpush1.msra.mxu0 0.0
        %1271 = vmatprep.subr.mxu0 0.0
        %1272 = vmatpush1.msra.mxu0 0.0
        %1273 = vmatprep.mubr.f32.mxu0 0.0
        %1274 = vmatmul.mubr.f32.gmra.mrb[0].mxu0 %v1130
        %v1275 = vpop.f32.mrb[0].mxu0
        %v1276 = vadd.f32 0.0, %v1275
        %v1277 = vpop.f32.mrb[0].mxu0
        %1278 = vdwg.mxu0
        %v1279 = vadd.f32 %v1089, %v1205
        %v1280 = vadd.f32 %v1090, %v1207
        %v1281 = vadd.f32 %v1091, %v1276
        %v1282 = vmul.f32 %v1109, %v1109
        %v1283 = vmul.f32 %v1110, %v1110
        %1286 = vrot.lane.b32.xlu0 %v1282, 108
        %v1287 = vpop.permute.xlu0 %1286
        %1288 = vrot.lane.b32.xlu0 %v1283, 108
        %v1289 = vpop.permute.xlu0 %1288
        %v1290 = vrot.slane %v1287, 4
        %v1291 = vrot.slane %v1289, 4
        %v1292 = vsel %vm224, %v1290, %v1291
        %v1293 = vsel %vm1125, %v1287, %v1292
        %v1294 = vsel %vm1125, %v1289, %v1291
        %v1297 = vadd.f32 %v1107, %v1293
        %v1298 = vadd.f32 %v1108, %v1294
        %v1299 = vld [vmem:[%s195] sm:$0xff]
        %v1300 = vld [vmem:[%s195 + $0x8] sm:$0xff]
        %s1301 = scalar_lea.vmem %s1, 48
        %v1302 = vld [vmem:[%s1301] sm:$0xff]
        %v1305 = vcombine.high %v1299, %v1299
        %v1306 = vcombine.high %v1300, %v1300
        %1307 = vrot.lane.b32.xlu0 %v1299, 92
        %v1308 = vpop.permute.xlu0 %1307
        %1309 = vrot.lane.b32.xlu0 %v1305, 92
        %v1310 = vpop.permute.xlu0 %1309
        %1311 = vrot.lane.b32.xlu0 %v1300, 92
        %v1312 = vpop.permute.xlu0 %1311
        %1313 = vrot.lane.b32.xlu0 %v1306, 92
        %v1314 = vpop.permute.xlu0 %1313
        %vm1315 = vcmask 752640
        %v1316 = vsel %vm1315, %v1308, %v1310
        %v1317 = vsel %vm1315, %v1310, %v1312
        %v1318 = vsel %vm1315, %v1312, %v1314
        %v1320 = vsel %vm220, %v1302, 0
        %v1322 = vsel %vm224, %v1316, 0
        %v1324 = vsel %vm224, %v1317, 0
        %v1326 = vsel %vm224, %v1318, 0
        %1328 = vmatprep.subr.mxu0 %v1324
        %1329 = vmatpush1.msra.mxu0 %v1322
        %1330 = vmatprep.subr.mxu0 0.0
        %1331 = vmatpush1.msra.mxu0 0.0
        %1332 = vmatprep.subr.mxu0 0.0
        %1333 = vmatpush1.msra.mxu0 0.0
        %1334 = vmatprep.subr.mxu0 0.0
        %1335 = vmatpush1.msra.mxu0 0.0
        %1336 = vmatprep.subr.mxu0 0.0
        %1337 = vmatpush1.msra.mxu0 0.0
        %1338 = vmatprep.subr.mxu0 0.0
        %1339 = vmatpush1.msra.mxu0 0.0
        %1340 = vmatprep.subr.mxu0 0.0
        %1341 = vmatpush1.msra.mxu0 0.0
        %1342 = vmatprep.subr.mxu0 0.0
        %1343 = vmatpush1.msra.mxu0 0.0
        %1344 = vmatprep.subr.mxu0 0.0
        %1345 = vmatpush1.msra.mxu0 0.0
        %1346 = vmatprep.subr.mxu0 0.0
        %1347 = vmatpush1.msra.mxu0 0.0
        %1348 = vmatprep.subr.mxu0 0.0
        %1349 = vmatpush1.msra.mxu0 0.0
        %1350 = vmatprep.subr.mxu0 0.0
        %1351 = vmatpush1.msra.mxu0 0.0
        %1352 = vmatprep.subr.mxu0 0.0
        %1353 = vmatpush1.msra.mxu0 0.0
        %1354 = vmatprep.subr.mxu0 0.0
        %1355 = vmatpush1.msra.mxu0 0.0
        %1356 = vmatprep.subr.mxu0 0.0
        %1357 = vmatpush1.msra.mxu0 0.0
        %1358 = vmatprep.subr.mxu0 0.0
        %1359 = vmatpush1.msra.mxu0 0.0
        %1360 = vmatprep.subr.mxu0 0.0
        %1361 = vmatpush1.msra.mxu0 0.0
        %1362 = vmatprep.subr.mxu0 0.0
        %1363 = vmatpush1.msra.mxu0 0.0
        %1364 = vmatprep.subr.mxu0 0.0
        %1365 = vmatpush1.msra.mxu0 0.0
        %1366 = vmatprep.subr.mxu0 0.0
        %1367 = vmatpush1.msra.mxu0 0.0
        %1368 = vmatprep.subr.mxu0 0.0
        %1369 = vmatpush1.msra.mxu0 0.0
        %1370 = vmatprep.subr.mxu0 0.0
        %1371 = vmatpush1.msra.mxu0 0.0
        %1372 = vmatprep.subr.mxu0 0.0
        %1373 = vmatpush1.msra.mxu0 0.0
        %1374 = vmatprep.subr.mxu0 0.0
        %1375 = vmatpush1.msra.mxu0 0.0
        %1376 = vmatprep.subr.mxu0 0.0
        %1377 = vmatpush1.msra.mxu0 0.0
        %1378 = vmatprep.subr.mxu0 0.0
        %1379 = vmatpush1.msra.mxu0 0.0
        %1380 = vmatprep.subr.mxu0 0.0
        %1381 = vmatpush1.msra.mxu0 0.0
        %1382 = vmatprep.subr.mxu0 0.0
        %1383 = vmatpush1.msra.mxu0 0.0
        %1384 = vmatprep.subr.mxu0 0.0
        %1385 = vmatpush1.msra.mxu0 0.0
        %1386 = vmatprep.subr.mxu0 0.0
        %1387 = vmatpush1.msra.mxu0 0.0
        %1388 = vmatprep.subr.mxu0 0.0
        %1389 = vmatpush1.msra.mxu0 0.0
        %1390 = vmatprep.subr.mxu0 0.0
        %1391 = vmatpush1.msra.mxu0 0.0
        %1392 = vmatprep.mubr.f32.mxu0 0.0
        %1393 = vmatmul.mubr.f32.gmra.mrb[0].mxu0 %v1320
        %v1394 = vpop.f32.mrb[0].mxu0
        %v1395 = vadd.f32 0.0, %v1394
        %v1396 = vpop.f32.mrb[0].mxu0
        %v1397 = vadd.f32 0.0, %v1396
        %1398 = vdwg.mxu0
        %1399 = vmatprep.subr.mxu0 0.0
        %1400 = vmatpush1.msra.mxu0 %v1326
        %1401 = vmatprep.subr.mxu0 0.0
        %1402 = vmatpush1.msra.mxu0 0.0
        %1403 = vmatprep.subr.mxu0 0.0
        %1404 = vmatpush1.msra.mxu0 0.0
        %1405 = vmatprep.subr.mxu0 0.0
        %1406 = vmatpush1.msra.mxu0 0.0
        %1407 = vmatprep.subr.mxu0 0.0
        %1408 = vmatpush1.msra.mxu0 0.0
        %1409 = vmatprep.subr.mxu0 0.0
        %1410 = vmatpush1.msra.mxu0 0.0
        %1411 = vmatprep.subr.mxu0 0.0
        %1412 = vmatpush1.msra.mxu0 0.0
        %1413 = vmatprep.subr.mxu0 0.0
        %1414 = vmatpush1.msra.mxu0 0.0
        %1415 = vmatprep.subr.mxu0 0.0
        %1416 = vmatpush1.msra.mxu0 0.0
        %1417 = vmatprep.subr.mxu0 0.0
        %1418 = vmatpush1.msra.mxu0 0.0
        %1419 = vmatprep.subr.mxu0 0.0
        %1420 = vmatpush1.msra.mxu0 0.0
        %1421 = vmatprep.subr.mxu0 0.0
        %1422 = vmatpush1.msra.mxu0 0.0
        %1423 = vmatprep.subr.mxu0 0.0
        %1424 = vmatpush1.msra.mxu0 0.0
        %1425 = vmatprep.subr.mxu0 0.0
        %1426 = vmatpush1.msra.mxu0 0.0
        %1427 = vmatprep.subr.mxu0 0.0
        %1428 = vmatpush1.msra.mxu0 0.0
        %1429 = vmatprep.subr.mxu0 0.0
        %1430 = vmatpush1.msra.mxu0 0.0
        %1431 = vmatprep.subr.mxu0 0.0
        %1432 = vmatpush1.msra.mxu0 0.0
        %1433 = vmatprep.subr.mxu0 0.0
        %1434 = vmatpush1.msra.mxu0 0.0
        %1435 = vmatprep.subr.mxu0 0.0
        %1436 = vmatpush1.msra.mxu0 0.0
        %1437 = vmatprep.subr.mxu0 0.0
        %1438 = vmatpush1.msra.mxu0 0.0
        %1439 = vmatprep.subr.mxu0 0.0
        %1440 = vmatpush1.msra.mxu0 0.0
        %1441 = vmatprep.subr.mxu0 0.0
        %1442 = vmatpush1.msra.mxu0 0.0
        %1443 = vmatprep.subr.mxu0 0.0
        %1444 = vmatpush1.msra.mxu0 0.0
        %1445 = vmatprep.subr.mxu0 0.0
        %1446 = vmatpush1.msra.mxu0 0.0
        %1447 = vmatprep.subr.mxu0 0.0
        %1448 = vmatpush1.msra.mxu0 0.0
        %1449 = vmatprep.subr.mxu0 0.0
        %1450 = vmatpush1.msra.mxu0 0.0
        %1451 = vmatprep.subr.mxu0 0.0
        %1452 = vmatpush1.msra.mxu0 0.0
        %1453 = vmatprep.subr.mxu0 0.0
        %1454 = vmatpush1.msra.mxu0 0.0
        %1455 = vmatprep.subr.mxu0 0.0
        %1456 = vmatpush1.msra.mxu0 0.0
        %1457 = vmatprep.subr.mxu0 0.0
        %1458 = vmatpush1.msra.mxu0 0.0
        %1459 = vmatprep.subr.mxu0 0.0
        %1460 = vmatpush1.msra.mxu0 0.0
        %1461 = vmatprep.subr.mxu0 0.0
        %1462 = vmatpush1.msra.mxu0 0.0
        %1463 = vmatprep.mubr.f32.mxu0 0.0
        %1464 = vmatmul.mubr.f32.gmra.mrb[0].mxu0 %v1320
        %v1465 = vpop.f32.mrb[0].mxu0
        %v1466 = vadd.f32 0.0, %v1465
        %v1467 = vpop.f32.mrb[0].mxu0
        %1468 = vdwg.mxu0
        %v1469 = vadd.f32 %v1279, %v1395
        %v1470 = vadd.f32 %v1280, %v1397
        %v1471 = vadd.f32 %v1281, %v1466
        %v1472 = vmul.f32 %v1299, %v1299
        %v1473 = vmul.f32 %v1300, %v1300
        %1476 = vrot.lane.b32.xlu0 %v1472, 92
        %v1477 = vpop.permute.xlu0 %1476
        %1478 = vrot.lane.b32.xlu0 %v1473, 92
        %v1479 = vpop.permute.xlu0 %1478
        %v1480 = vrot.slane %v1477, 4
        %v1481 = vrot.slane %v1479, 4
        %v1482 = vsel %vm224, %v1480, %v1481
        %v1483 = vsel %vm1315, %v1477, %v1482
        %v1484 = vsel %vm1315, %v1479, %v1481
        %v1487 = vadd.f32 %v1297, %v1483
        %v1488 = vadd.f32 %v1298, %v1484
        %v1489 = vld [vmem:[%s195] sm:$0xff]
        %v1490 = vld [vmem:[%s195 + $0x8] sm:$0xff]
        %s1491 = scalar_lea.vmem %s1, 56
        %v1492 = vld [vmem:[%s1491] sm:$0xff]
        %v1495 = vcombine.high %v1489, %v1489
        %v1496 = vcombine.high %v1490, %v1490
        %1497 = vrot.lane.b32.xlu0 %v1489, 91
        %v1498 = vpop.permute.xlu0 %1497
        %1499 = vrot.lane.b32.xlu0 %v1495, 91
        %v1500 = vpop.permute.xlu0 %1499
        %1501 = vrot.lane.b32.xlu0 %v1490, 91
        %v1502 = vpop.permute.xlu0 %1501
        %1503 = vrot.lane.b32.xlu0 %v1496, 91
        %v1504 = vpop.permute.xlu0 %1503
        %vm1505 = vcmask 744448
        %v1506 = vsel %vm1505, %v1498, %v1500
        %v1507 = vsel %vm1505, %v1500, %v1502
        %v1508 = vsel %vm1505, %v1502, %v1504
        %v1510 = vsel %vm220, %v1492, 0
        %v1512 = vsel %vm224, %v1506, 0
        %v1514 = vsel %vm224, %v1507, 0
        %v1516 = vsel %vm224, %v1508, 0
        %1518 = vmatprep.subr.mxu0 %v1514
        %1519 = vmatpush1.msra.mxu0 %v1512
        %1520 = vmatprep.subr.mxu0 0.0
        %1521 = vmatpush1.msra.mxu0 0.0
        %1522 = vmatprep.subr.mxu0 0.0
        %1523 = vmatpush1.msra.mxu0 0.0
        %1524 = vmatprep.subr.mxu0 0.0
        %1525 = vmatpush1.msra.mxu0 0.0
        %1526 = vmatprep.subr.mxu0 0.0
        %1527 = vmatpush1.msra.mxu0 0.0
        %1528 = vmatprep.subr.mxu0 0.0
        %1529 = vmatpush1.msra.mxu0 0.0
        %1530 = vmatprep.subr.mxu0 0.0
        %1531 = vmatpush1.msra.mxu0 0.0
        %1532 = vmatprep.subr.mxu0 0.0
        %1533 = vmatpush1.msra.mxu0 0.0
        %1534 = vmatprep.subr.mxu0 0.0
        %1535 = vmatpush1.msra.mxu0 0.0
        %1536 = vmatprep.subr.mxu0 0.0
        %1537 = vmatpush1.msra.mxu0 0.0
        %1538 = vmatprep.subr.mxu0 0.0
        %1539 = vmatpush1.msra.mxu0 0.0
        %1540 = vmatprep.subr.mxu0 0.0
        %1541 = vmatpush1.msra.mxu0 0.0
        %1542 = vmatprep.subr.mxu0 0.0
        %1543 = vmatpush1.msra.mxu0 0.0
        %1544 = vmatprep.subr.mxu0 0.0
        %1545 = vmatpush1.msra.mxu0 0.0
        %1546 = vmatprep.subr.mxu0 0.0
        %1547 = vmatpush1.msra.mxu0 0.0
        %1548 = vmatprep.subr.mxu0 0.0
        %1549 = vmatpush1.msra.mxu0 0.0
        %1550 = vmatprep.subr.mxu0 0.0
        %1551 = vmatpush1.msra.mxu0 0.0
        %1552 = vmatprep.subr.mxu0 0.0
        %1553 = vmatpush1.msra.mxu0 0.0
        %1554 = vmatprep.subr.mxu0 0.0
        %1555 = vmatpush1.msra.mxu0 0.0
        %1556 = vmatprep.subr.mxu0 0.0
        %1557 = vmatpush1.msra.mxu0 0.0
        %1558 = vmatprep.subr.mxu0 0.0
        %1559 = vmatpush1.msra.mxu0 0.0
        %1560 = vmatprep.subr.mxu0 0.0
        %1561 = vmatpush1.msra.mxu0 0.0
        %1562 = vmatprep.subr.mxu0 0.0
        %1563 = vmatpush1.msra.mxu0 0.0
        %1564 = vmatprep.subr.mxu0 0.0
        %1565 = vmatpush1.msra.mxu0 0.0
        %1566 = vmatprep.subr.mxu0 0.0
        %1567 = vmatpush1.msra.mxu0 0.0
        %1568 = vmatprep.subr.mxu0 0.0
        %1569 = vmatpush1.msra.mxu0 0.0
        %1570 = vmatprep.subr.mxu0 0.0
        %1571 = vmatpush1.msra.mxu0 0.0
        %1572 = vmatprep.subr.mxu0 0.0
        %1573 = vmatpush1.msra.mxu0 0.0
        %1574 = vmatprep.subr.mxu0 0.0
        %1575 = vmatpush1.msra.mxu0 0.0
        %1576 = vmatprep.subr.mxu0 0.0
        %1577 = vmatpush1.msra.mxu0 0.0
        %1578 = vmatprep.subr.mxu0 0.0
        %1579 = vmatpush1.msra.mxu0 0.0
        %1580 = vmatprep.subr.mxu0 0.0
        %1581 = vmatpush1.msra.mxu0 0.0
        %1582 = vmatprep.mubr.f32.mxu0 0.0
        %1583 = vmatmul.mubr.f32.gmra.mrb[0].mxu0 %v1510
        %v1584 = vpop.f32.mrb[0].mxu0
        %v1585 = vadd.f32 0.0, %v1584
        %v1586 = vpop.f32.mrb[0].mxu0
        %v1587 = vadd.f32 0.0, %v1586
        %1588 = vdwg.mxu0
        %1589 = vmatprep.subr.mxu0 0.0
        %1590 = vmatpush1.msra.mxu0 %v1516
        %1591 = vmatprep.subr.mxu0 0.0
        %1592 = vmatpush1.msra.mxu0 0.0
        %1593 = vmatprep.subr.mxu0 0.0
        %1594 = vmatpush1.msra.mxu0 0.0
        %1595 = vmatprep.subr.mxu0 0.0
        %1596 = vmatpush1.msra.mxu0 0.0
        %1597 = vmatprep.subr.mxu0 0.0
        %1598 = vmatpush1.msra.mxu0 0.0
        %1599 = vmatprep.subr.mxu0 0.0
        %1600 = vmatpush1.msra.mxu0 0.0
        %1601 = vmatprep.subr.mxu0 0.0
        %1602 = vmatpush1.msra.mxu0 0.0
        %1603 = vmatprep.subr.mxu0 0.0
        %1604 = vmatpush1.msra.mxu0 0.0
        %1605 = vmatprep.subr.mxu0 0.0
        %1606 = vmatpush1.msra.mxu0 0.0
        %1607 = vmatprep.subr.mxu0 0.0
        %1608 = vmatpush1.msra.mxu0 0.0
        %1609 = vmatprep.subr.mxu0 0.0
        %1610 = vmatpush1.msra.mxu0 0.0
        %1611 = vmatprep.subr.mxu0 0.0
        %1612 = vmatpush1.msra.mxu0 0.0
        %1613 = vmatprep.subr.mxu0 0.0
        %1614 = vmatpush1.msra.mxu0 0.0
        %1615 = vmatprep.subr.mxu0 0.0
        %1616 = vmatpush1.msra.mxu0 0.0
        %1617 = vmatprep.subr.mxu0 0.0
        %1618 = vmatpush1.msra.mxu0 0.0
        %1619 = vmatprep.subr.mxu0 0.0
        %1620 = vmatpush1.msra.mxu0 0.0
        %1621 = vmatprep.subr.mxu0 0.0
        %1622 = vmatpush1.msra.mxu0 0.0
        %1623 = vmatprep.subr.mxu0 0.0
        %1624 = vmatpush1.msra.mxu0 0.0
        %1625 = vmatprep.subr.mxu0 0.0
        %1626 = vmatpush1.msra.mxu0 0.0
        %1627 = vmatprep.subr.mxu0 0.0
        %1628 = vmatpush1.msra.mxu0 0.0
        %1629 = vmatprep.subr.mxu0 0.0
        %1630 = vmatpush1.msra.mxu0 0.0
        %1631 = vmatprep.subr.mxu0 0.0
        %1632 = vmatpush1.msra.mxu0 0.0
        %1633 = vmatprep.subr.mxu0 0.0
        %1634 = vmatpush1.msra.mxu0 0.0
        %1635 = vmatprep.subr.mxu0 0.0
        %1636 = vmatpush1.msra.mxu0 0.0
        %1637 = vmatprep.subr.mxu0 0.0
        %1638 = vmatpush1.msra.mxu0 0.0
        %1639 = vmatprep.subr.mxu0 0.0
        %1640 = vmatpush1.msra.mxu0 0.0
        %1641 = vmatprep.subr.mxu0 0.0
        %1642 = vmatpush1.msra.mxu0 0.0
        %1643 = vmatprep.subr.mxu0 0.0
        %1644 = vmatpush1.msra.mxu0 0.0
        %1645 = vmatprep.subr.mxu0 0.0
        %1646 = vmatpush1.msra.mxu0 0.0
        %1647 = vmatprep.subr.mxu0 0.0
        %1648 = vmatpush1.msra.mxu0 0.0
        %1649 = vmatprep.subr.mxu0 0.0
        %1650 = vmatpush1.msra.mxu0 0.0
        %1651 = vmatprep.subr.mxu0 0.0
        %1652 = vmatpush1.msra.mxu0 0.0
        %1653 = vmatprep.mubr.f32.mxu0 0.0
        %1654 = vmatmul.mubr.f32.gmra.mrb[0].mxu0 %v1510
        %v1655 = vpop.f32.mrb[0].mxu0
        %v1656 = vadd.f32 0.0, %v1655
        %v1657 = vpop.f32.mrb[0].mxu0
        %1658 = vdwg.mxu0
        %v1659 = vadd.f32 %v1469, %v1585
        %v1660 = vadd.f32 %v1470, %v1587
        %v1661 = vadd.f32 %v1471, %v1656
        %v1662 = vmul.f32 %v1489, %v1489
        %v1663 = vmul.f32 %v1490, %v1490
        %1666 = vrot.lane.b32.xlu0 %v1662, 91
        %v1667 = vpop.permute.xlu0 %1666
        %1668 = vrot.lane.b32.xlu0 %v1663, 91
        %v1669 = vpop.permute.xlu0 %1668
        %v1670 = vrot.slane %v1667, 4
        %v1671 = vrot.slane %v1669, 4
        %v1672 = vsel %vm224, %v1670, %v1671
        %v1673 = vsel %vm1505, %v1667, %v1672
        %v1674 = vsel %vm1505, %v1669, %v1671
        %v1677 = vadd.f32 %v1487, %v1673
        %v1678 = vadd.f32 %v1488, %v1674
        %v1679 = vld [vmem:[%s195] sm:$0xff]
        %v1680 = vld [vmem:[%s195 + $0x8] sm:$0xff]
        %s1681 = scalar_lea.vmem %s1, 64
        %v1682 = vld [vmem:[%s1681] sm:$0xff]
        %v1685 = vcombine.high %v1679, %v1679
        %v1686 = vcombine.high %v1680, %v1680
        %1687 = vrot.lane.b32.xlu0 %v1679, 90
        %v1688 = vpop.permute.xlu0 %1687
        %1689 = vrot.lane.b32.xlu0 %v1685, 90
        %v1690 = vpop.permute.xlu0 %1689
        %1691 = vrot.lane.b32.xlu0 %v1680, 90
        %v1692 = vpop.permute.xlu0 %1691
        %1693 = vrot.lane.b32.xlu0 %v1686, 90
        %v1694 = vpop.permute.xlu0 %1693
        %vm1695 = vcmask 736256
        %v1696 = vsel %vm1695, %v1688, %v1690
        %v1697 = vsel %vm1695, %v1690, %v1692
        %v1698 = vsel %vm1695, %v1692, %v1694
        %v1700 = vsel %vm220, %v1682, 0
        %v1702 = vsel %vm224, %v1696, 0
        %v1704 = vsel %vm224, %v1697, 0
        %v1706 = vsel %vm224, %v1698, 0
        %1708 = vmatprep.subr.mxu0 %v1704
        %1709 = vmatpush1.msra.mxu0 %v1702
        %1710 = vmatprep.subr.mxu0 0.0
        %1711 = vmatpush1.msra.mxu0 0.0
        %1712 = vmatprep.subr.mxu0 0.0
        %1713 = vmatpush1.msra.mxu0 0.0
        %1714 = vmatprep.subr.mxu0 0.0
        %1715 = vmatpush1.msra.mxu0 0.0
        %1716 = vmatprep.subr.mxu0 0.0
        %1717 = vmatpush1.msra.mxu0 0.0
        %1718 = vmatprep.subr.mxu0 0.0
        %1719 = vmatpush1.msra.mxu0 0.0
        %1720 = vmatprep.subr.mxu0 0.0
        %1721 = vmatpush1.msra.mxu0 0.0
        %1722 = vmatprep.subr.mxu0 0.0
        %1723 = vmatpush1.msra.mxu0 0.0
        %1724 = vmatprep.subr.mxu0 0.0
        %1725 = vmatpush1.msra.mxu0 0.0
        %1726 = vmatprep.subr.mxu0 0.0
        %1727 = vmatpush1.msra.mxu0 0.0
        %1728 = vmatprep.subr.mxu0 0.0
        %1729 = vmatpush1.msra.mxu0 0.0
        %1730 = vmatprep.subr.mxu0 0.0
        %1731 = vmatpush1.msra.mxu0 0.0
        %1732 = vmatprep.subr.mxu0 0.0
        %1733 = vmatpush1.msra.mxu0 0.0
        %1734 = vmatprep.subr.mxu0 0.0
        %1735 = vmatpush1.msra.mxu0 0.0
        %1736 = vmatprep.subr.mxu0 0.0
        %1737 = vmatpush1.msra.mxu0 0.0
        %1738 = vmatprep.subr.mxu0 0.0
        %1739 = vmatpush1.msra.mxu0 0.0
        %1740 = vmatprep.subr.mxu0 0.0
        %1741 = vmatpush1.msra.mxu0 0.0
        %1742 = vmatprep.subr.mxu0 0.0
        %1743 = vmatpush1.msra.mxu0 0.0
        %1744 = vmatprep.subr.mxu0 0.0
        %1745 = vmatpush1.msra.mxu0 0.0
        %1746 = vmatprep.subr.mxu0 0.0
        %1747 = vmatpush1.msra.mxu0 0.0
        %1748 = vmatprep.subr.mxu0 0.0
        %1749 = vmatpush1.msra.mxu0 0.0
        %1750 = vmatprep.subr.mxu0 0.0
        %1751 = vmatpush1.msra.mxu0 0.0
        %1752 = vmatprep.subr.mxu0 0.0
        %1753 = vmatpush1.msra.mxu0 0.0
        %1754 = vmatprep.subr.mxu0 0.0
        %1755 = vmatpush1.msra.mxu0 0.0
        %1756 = vmatprep.subr.mxu0 0.0
        %1757 = vmatpush1.msra.mxu0 0.0
        %1758 = vmatprep.subr.mxu0 0.0
        %1759 = vmatpush1.msra.mxu0 0.0
        %1760 = vmatprep.subr.mxu0 0.0
        %1761 = vmatpush1.msra.mxu0 0.0
        %1762 = vmatprep.subr.mxu0 0.0
        %1763 = vmatpush1.msra.mxu0 0.0
        %1764 = vmatprep.subr.mxu0 0.0
        %1765 = vmatpush1.msra.mxu0 0.0
        %1766 = vmatprep.subr.mxu0 0.0
        %1767 = vmatpush1.msra.mxu0 0.0
        %1768 = vmatprep.subr.mxu0 0.0
        %1769 = vmatpush1.msra.mxu0 0.0
        %1770 = vmatprep.subr.mxu0 0.0
        %1771 = vmatpush1.msra.mxu0 0.0
        %1772 = vmatprep.mubr.f32.mxu0 0.0
        %1773 = vmatmul.mubr.f32.gmra.mrb[0].mxu0 %v1700
        %v1774 = vpop.f32.mrb[0].mxu0
        %v1775 = vadd.f32 0.0, %v1774
        %v1776 = vpop.f32.mrb[0].mxu0
        %v1777 = vadd.f32 0.0, %v1776
        %1778 = vdwg.mxu0
        %1779 = vmatprep.subr.mxu0 0.0
        %1780 = vmatpush1.msra.mxu0 %v1706
        %1781 = vmatprep.subr.mxu0 0.0
        %1782 = vmatpush1.msra.mxu0 0.0
        %1783 = vmatprep.subr.mxu0 0.0
        %1784 = vmatpush1.msra.mxu0 0.0
        %1785 = vmatprep.subr.mxu0 0.0
        %1786 = vmatpush1.msra.mxu0 0.0
        %1787 = vmatprep.subr.mxu0 0.0
        %1788 = vmatpush1.msra.mxu0 0.0
        %1789 = vmatprep.subr.mxu0 0.0
        %1790 = vmatpush1.msra.mxu0 0.0
        %1791 = vmatprep.subr.mxu0 0.0
        %1792 = vmatpush1.msra.mxu0 0.0
        %1793 = vmatprep.subr.mxu0 0.0
        %1794 = vmatpush1.msra.mxu0 0.0
        %1795 = vmatprep.subr.mxu0 0.0
        %1796 = vmatpush1.msra.mxu0 0.0
        %1797 = vmatprep.subr.mxu0 0.0
        %1798 = vmatpush1.msra.mxu0 0.0
        %1799 = vmatprep.subr.mxu0 0.0
        %1800 = vmatpush1.msra.mxu0 0.0
        %1801 = vmatprep.subr.mxu0 0.0
        %1802 = vmatpush1.msra.mxu0 0.0
        %1803 = vmatprep.subr.mxu0 0.0
        %1804 = vmatpush1.msra.mxu0 0.0
        %1805 = vmatprep.subr.mxu0 0.0
        %1806 = vmatpush1.msra.mxu0 0.0
        %1807 = vmatprep.subr.mxu0 0.0
        %1808 = vmatpush1.msra.mxu0 0.0
        %1809 = vmatprep.subr.mxu0 0.0
        %1810 = vmatpush1.msra.mxu0 0.0
        %1811 = vmatprep.subr.mxu0 0.0
        %1812 = vmatpush1.msra.mxu0 0.0
        %1813 = vmatprep.subr.mxu0 0.0
        %1814 = vmatpush1.msra.mxu0 0.0
        %1815 = vmatprep.subr.mxu0 0.0
        %1816 = vmatpush1.msra.mxu0 0.0
        %1817 = vmatprep.subr.mxu0 0.0
        %1818 = vmatpush1.msra.mxu0 0.0
        %1819 = vmatprep.subr.mxu0 0.0
        %1820 = vmatpush1.msra.mxu0 0.0
        %1821 = vmatprep.subr.mxu0 0.0
        %1822 = vmatpush1.msra.mxu0 0.0
        %1823 = vmatprep.subr.mxu0 0.0
        %1824 = vmatpush1.msra.mxu0 0.0
        %1825 = vmatprep.subr.mxu0 0.0
        %1826 = vmatpush1.msra.mxu0 0.0
        %1827 = vmatprep.subr.mxu0 0.0
        %1828 = vmatpush1.msra.mxu0 0.0
        %1829 = vmatprep.subr.mxu0 0.0
        %1830 = vmatpush1.msra.mxu0 0.0
        %1831 = vmatprep.subr.mxu0 0.0
        %1832 = vmatpush1.msra.mxu0 0.0
        %1833 = vmatprep.subr.mxu0 0.0
        %1834 = vmatpush1.msra.mxu0 0.0
        %1835 = vmatprep.subr.mxu0 0.0
        %1836 = vmatpush1.msra.mxu0 0.0
        %1837 = vmatprep.subr.mxu0 0.0
        %1838 = vmatpush1.msra.mxu0 0.0
        %1839 = vmatprep.subr.mxu0 0.0
        %1840 = vmatpush1.msra.mxu0 0.0
        %1841 = vmatprep.subr.mxu0 0.0
        %1842 = vmatpush1.msra.mxu0 0.0
        %1843 = vmatprep.mubr.f32.mxu0 0.0
        %1844 = vmatmul.mubr.f32.gmra.mrb[0].mxu0 %v1700
        %v1845 = vpop.f32.mrb[0].mxu0
        %v1846 = vadd.f32 0.0, %v1845
        %v1847 = vpop.f32.mrb[0].mxu0
        %1848 = vdwg.mxu0
        %v1849 = vadd.f32 %v1659, %v1775
        %v1850 = vadd.f32 %v1660, %v1777
        %v1851 = vadd.f32 %v1661, %v1846
        %v1852 = vmul.f32 %v1679, %v1679
        %v1853 = vmul.f32 %v1680, %v1680
        %1856 = vrot.lane.b32.xlu0 %v1852, 90
        %v1857 = vpop.permute.xlu0 %1856
        %1858 = vrot.lane.b32.xlu0 %v1853, 90
        %v1859 = vpop.permute.xlu0 %1858
        %v1860 = vrot.slane %v1857, 4
        %v1861 = vrot.slane %v1859, 4
        %v1862 = vsel %vm224, %v1860, %v1861
        %v1863 = vsel %vm1695, %v1857, %v1862
        %v1864 = vsel %vm1695, %v1859, %v1861
        %v1867 = vadd.f32 %v1677, %v1863
        %v1868 = vadd.f32 %v1678, %v1864
        %v1869 = vld [vmem:[%s2] sm:$0xff]
        %1871 = vset.pattern.permute.xlu0 0
        %1872 = vperm.xlu0 %1871, %v1869
        %v1873 = vpop.permute.xlu0 %1872
        %v1875 = vadd.f32 %v1849, %v1873
        %v1876 = vadd.f32 %v1850, %v1873
        %v1877 = vadd.f32 %v1851, %v1873
        %v1879 = vcombine.high %v1867, %v1867
        %v1881 = vsel %vm224, %v1867, 0.0
        %v1882 = vrot.slane %v1881, 4
        %v1883 = vadd.f32 %v1881, %v1882
        %v1884 = vrot.slane %v1883, 2
        %v1885 = vadd.f32 %v1883, %v1884
        %v1886 = vrot.slane %v1885, 1
        %v1887 = vadd.f32 %v1885, %v1886
        %v1888 = vsel %vm224, %v1879, 0.0
        %v1889 = vrot.slane %v1888, 4
        %v1890 = vadd.f32 %v1888, %v1889
        %v1891 = vrot.slane %v1890, 2
        %v1892 = vadd.f32 %v1890, %v1891
        %v1893 = vrot.slane %v1892, 1
        %v1894 = vadd.f32 %v1892, %v1893
        %v1895 = vsel %vm224, %v1868, 0.0
        %v1896 = vrot.slane %v1895, 4
        %v1897 = vadd.f32 %v1895, %v1896
        %v1898 = vrot.slane %v1897, 2
        %v1899 = vadd.f32 %v1897, %v1898
        %v1900 = vrot.slane %v1899, 1
        %v1901 = vadd.f32 %v1899, %v1900
        %v1902 = vsub.f32 %v1875, %v1887
        %v1903 = vsub.f32 %v1876, %v1894
        %v1904 = vsub.f32 %v1877, %v1901
        %v1905 = vmul.f32 %v1902, 1.442695
        %v1906 = vpow.pop %v1905
        %v1907 = vmul.f32 %v1903, 1.442695
        %v1908 = vpow.pop %v1907
        %v1909 = vmul.f32 %v1904, 1.442695
        %v1910 = vpow.pop %v1909
        %v1911 = vld [vmem:[%s3] sm:$0xff]
        %vm1912 = vcmask 64512
        %v1914 = vsel %vm1912, %v1911, 0
        %1916 = vmatprep.subr.mxu0 %v1908
        %1917 = vmatpush1.msra.mxu0 %v1906
        %1918 = vmatprep.subr.mxu0 0.0
        %1919 = vmatpush1.msra.mxu0 0.0
        %1920 = vmatprep.subr.mxu0 0.0
        %1921 = vmatpush1.msra.mxu0 0.0
        %1922 = vmatprep.subr.mxu0 0.0
        %1923 = vmatpush1.msra.mxu0 0.0
        %1924 = vmatprep.subr.mxu0 0.0
        %1925 = vmatpush1.msra.mxu0 0.0
        %1926 = vmatprep.subr.mxu0 0.0
        %1927 = vmatpush1.msra.mxu0 0.0
        %1928 = vmatprep.subr.mxu0 0.0
        %1929 = vmatpush1.msra.mxu0 0.0
        %1930 = vmatprep.subr.mxu0 0.0
        %1931 = vmatpush1.msra.mxu0 0.0
        %1932 = vmatprep.subr.mxu0 0.0
        %1933 = vmatpush1.msra.mxu0 0.0
        %1934 = vmatprep.subr.mxu0 0.0
        %1935 = vmatpush1.msra.mxu0 0.0
        %1936 = vmatprep.subr.mxu0 0.0
        %1937 = vmatpush1.msra.mxu0 0.0
        %1938 = vmatprep.subr.mxu0 0.0
        %1939 = vmatpush1.msra.mxu0 0.0
        %1940 = vmatprep.subr.mxu0 0.0
        %1941 = vmatpush1.msra.mxu0 0.0
        %1942 = vmatprep.subr.mxu0 0.0
        %1943 = vmatpush1.msra.mxu0 0.0
        %1944 = vmatprep.subr.mxu0 0.0
        %1945 = vmatpush1.msra.mxu0 0.0
        %1946 = vmatprep.subr.mxu0 0.0
        %1947 = vmatpush1.msra.mxu0 0.0
        %1948 = vmatprep.subr.mxu0 0.0
        %1949 = vmatpush1.msra.mxu0 0.0
        %1950 = vmatprep.subr.mxu0 0.0
        %1951 = vmatpush1.msra.mxu0 0.0
        %1952 = vmatprep.subr.mxu0 0.0
        %1953 = vmatpush1.msra.mxu0 0.0
        %1954 = vmatprep.subr.mxu0 0.0
        %1955 = vmatpush1.msra.mxu0 0.0
        %1956 = vmatprep.subr.mxu0 0.0
        %1957 = vmatpush1.msra.mxu0 0.0
        %1958 = vmatprep.subr.mxu0 0.0
        %1959 = vmatpush1.msra.mxu0 0.0
        %1960 = vmatprep.subr.mxu0 0.0
        %1961 = vmatpush1.msra.mxu0 0.0
        %1962 = vmatprep.subr.mxu0 0.0
        %1963 = vmatpush1.msra.mxu0 0.0
        %1964 = vmatprep.subr.mxu0 0.0
        %1965 = vmatpush1.msra.mxu0 0.0
        %1966 = vmatprep.subr.mxu0 0.0
        %1967 = vmatpush1.msra.mxu0 0.0
        %1968 = vmatprep.subr.mxu0 0.0
        %1969 = vmatpush1.msra.mxu0 0.0
        %1970 = vmatprep.subr.mxu0 0.0
        %1971 = vmatpush1.msra.mxu0 0.0
        %1972 = vmatprep.subr.mxu0 0.0
        %1973 = vmatpush1.msra.mxu0 0.0
        %1974 = vmatprep.subr.mxu0 0.0
        %1975 = vmatpush1.msra.mxu0 0.0
        %1976 = vmatprep.subr.mxu0 0.0
        %1977 = vmatpush1.msra.mxu0 0.0
        %1978 = vmatprep.subr.mxu0 0.0
        %1979 = vmatpush1.msra.mxu0 0.0
        %1980 = vmatprep.mubr.f32.mxu0 0.0
        %1981 = vmatmul.mubr.f32.gmra.mrb[0].mxu0 %v1914
        %v1982 = vpop.f32.mrb[0].mxu0
        %v1983 = vadd.f32 0.0, %v1982
        %v1984 = vpop.f32.mrb[0].mxu0
        %v1985 = vadd.f32 0.0, %v1984
        %1986 = vdwg.mxu0
        %1987 = vmatprep.subr.mxu0 0.0
        %1988 = vmatpush1.msra.mxu0 %v1910
        %1989 = vmatprep.subr.mxu0 0.0
        %1990 = vmatpush1.msra.mxu0 0.0
        %1991 = vmatprep.subr.mxu0 0.0
        %1992 = vmatpush1.msra.mxu0 0.0
        %1993 = vmatprep.subr.mxu0 0.0
        %1994 = vmatpush1.msra.mxu0 0.0
        %1995 = vmatprep.subr.mxu0 0.0
        %1996 = vmatpush1.msra.mxu0 0.0
        %1997 = vmatprep.subr.mxu0 0.0
        %1998 = vmatpush1.msra.mxu0 0.0
        %1999 = vmatprep.subr.mxu0 0.0
        %2000 = vmatpush1.msra.mxu0 0.0
        %2001 = vmatprep.subr.mxu0 0.0
        %2002 = vmatpush1.msra.mxu0 0.0
        %2003 = vmatprep.subr.mxu0 0.0
        %2004 = vmatpush1.msra.mxu0 0.0
        %2005 = vmatprep.subr.mxu0 0.0
        %2006 = vmatpush1.msra.mxu0 0.0
        %2007 = vmatprep.subr.mxu0 0.0
        %2008 = vmatpush1.msra.mxu0 0.0
        %2009 = vmatprep.subr.mxu0 0.0
        %2010 = vmatpush1.msra.mxu0 0.0
        %2011 = vmatprep.subr.mxu0 0.0
        %2012 = vmatpush1.msra.mxu0 0.0
        %2013 = vmatprep.subr.mxu0 0.0
        %2014 = vmatpush1.msra.mxu0 0.0
        %2015 = vmatprep.subr.mxu0 0.0
        %2016 = vmatpush1.msra.mxu0 0.0
        %2017 = vmatprep.subr.mxu0 0.0
        %2018 = vmatpush1.msra.mxu0 0.0
        %2019 = vmatprep.subr.mxu0 0.0
        %2020 = vmatpush1.msra.mxu0 0.0
        %2021 = vmatprep.subr.mxu0 0.0
        %2022 = vmatpush1.msra.mxu0 0.0
        %2023 = vmatprep.subr.mxu0 0.0
        %2024 = vmatpush1.msra.mxu0 0.0
        %2025 = vmatprep.subr.mxu0 0.0
        %2026 = vmatpush1.msra.mxu0 0.0
        %2027 = vmatprep.subr.mxu0 0.0
        %2028 = vmatpush1.msra.mxu0 0.0
        %2029 = vmatprep.subr.mxu0 0.0
        %2030 = vmatpush1.msra.mxu0 0.0
        %2031 = vmatprep.subr.mxu0 0.0
        %2032 = vmatpush1.msra.mxu0 0.0
        %2033 = vmatprep.subr.mxu0 0.0
        %2034 = vmatpush1.msra.mxu0 0.0
        %2035 = vmatprep.subr.mxu0 0.0
        %2036 = vmatpush1.msra.mxu0 0.0
        %2037 = vmatprep.subr.mxu0 0.0
        %2038 = vmatpush1.msra.mxu0 0.0
        %2039 = vmatprep.subr.mxu0 0.0
        %2040 = vmatpush1.msra.mxu0 0.0
        %2041 = vmatprep.subr.mxu0 0.0
        %2042 = vmatpush1.msra.mxu0 0.0
        %2043 = vmatprep.subr.mxu0 0.0
        %2044 = vmatpush1.msra.mxu0 0.0
        %2045 = vmatprep.subr.mxu0 0.0
        %2046 = vmatpush1.msra.mxu0 0.0
        %2047 = vmatprep.subr.mxu0 0.0
        %2048 = vmatpush1.msra.mxu0 0.0
        %2049 = vmatprep.subr.mxu0 0.0
        %2050 = vmatpush1.msra.mxu0 0.0
        %2051 = vmatprep.mubr.f32.mxu0 0.0
        %2052 = vmatmul.mubr.f32.gmra.mrb[0].mxu0 %v1914
        %v2053 = vpop.f32.mrb[0].mxu0
        %v2054 = vadd.f32 0.0, %v2053
        %v2055 = vpop.f32.mrb[0].mxu0
        %2056 = vdwg.mxu0
        %2057 = vst [vmem:[%s190] sm:$0xff] %v1983
        %2058 = vst [vmem:[%s190 + $0x8] sm:$0xff] %v1985
        %2059 = vst [vmem:[%s190 + $0x10] sm:$0xff] %v2054
        %s2060 = sand.u32 %s115, 1
        %s2061 = scalar_lea.sflag [#allocation3], %s2060
        %s2062 = sand.u32 %s115, 1
        %s2063 = smul.addr %s2062, 24
        %s2064 = scalar_lea.vmem [#allocation2], %s2063
        // Predicated region
        $region37: #{tpu_custom_call.1} parent=35 // pred_check
          %p2065 = pneg %p125
        $region38: #{tpu_custom_call.1} parent=35 // pred_check_branch
          %2067 = sbr.rel (%p2065) target = $region40
        $region39: #{tpu_custom_call.1} parent=35 // pred_region
          %s2069 = ssub.s32 384, 384
          %2070 = vsyncadd %s2061, %s2069
          %s2071 = smul.addr %s18, 3
          %s2072 = smul.addr %s2071, 128
          %s2073 = scalar_lea.hbm %s4, %s2072
          %s2075 = sshll.u32 %s2064, 4
          %s2076 = int_to_ptr.vmem [resolvable:$true] %s2075
          %2078 = dma.vmem_to_hbm [thread:$0]  %s2076, 384, %s2073, %s2061
        $region40: #{tpu_custom_call.1} parent=35 // pred_fallthru
          _
      $region36: #{tpu_custom_call.1} parent=5 // pred_fallthru
        _
      %p2079 = scmp.le.s32.totalorder 2, %s13
      // Predicated region
      $region41: #{tpu_custom_call.1} parent=5 // pred_check
        %p2080 = pneg %p2079
      $region42: #{tpu_custom_call.1} parent=5 // pred_check_branch
        %2082 = sbr.rel (%p2080) target = $region44
      $region43: #{tpu_custom_call.1} parent=5 // pred_region
        %s2083 = ssub.s32 %s13, 2
        // Predicated region
        $region45: #{tpu_custom_call.1} parent=43 // pred_check
          %p2084 = pneg %p131
        $region46: #{tpu_custom_call.1} parent=43 // pred_check_branch
          %2086 = sbr.rel (%p2084) target = $region48
        $region47: #{tpu_custom_call.1} parent=43 // pred_region
          %s2087 = sand.u32 %s116, 1
          %s2088 = scalar_lea.sflag [#allocation3], %s2087
          %s2089 = sand.u32 %s116, 1
          %s2090 = smul.addr %s2089, 24
          %s2091 = scalar_lea.vmem [#allocation2], %s2090
          %2092 = dma.done %s2088, 384
        $region48: #{tpu_custom_call.1} parent=43 // pred_fallthru
          _
      $region44: #{tpu_custom_call.1} parent=5 // pred_fallthru
        _
    $region6: #{tpu_custom_call.1} parent=1 // loop_footer
      %s17 = sadd.s32 1, %s13
    $region7: #{tpu_custom_call.1} parent=1 // loop_footer_branch
      %12 = sbr.rel target = $region3
    $region8: #{tpu_custom_call.1} parent=1 // loop_exit
      _
    %2093 = vsyncpa [#allocation3], 1
    %s2094 = scalar_lea.sflag [#allocation3], 1
    %2095 = vsyncpa %s2094, 1

</llo_original>
